<compile_context>
chip_gen: v5e
topology: v5e:2x2
jax: 0.10.0
libtpu: 0.0.40
codegen_flags: <defaults>
</compile_context>

<pallas_src>
import math

import jax
import jax.numpy as jnp
from jax.experimental import pallas as pl
from jax.experimental.pallas import tpu as pltpu

# ----------------------------- config (small, BERT-like) -----------------------------
B = 2            # batch
S = 8            # sequence length
H = 32           # hidden size
NH = 2           # attention heads
DH = H // NH     # head dim
INTER = 64       # FFN intermediate size
LAYERS = 2       # encoder layers
VOCAB = 128      # lane-aligned small vocab
SENTIMENTS = 3
LN_EPS = 1e-12
NEG_INF = -1e9


# ----------------------------- in-kernel helpers -----------------------------
def _ln(x, g, b):
    mu = jnp.mean(x, axis=-1, keepdims=True)
    var = jnp.mean(jnp.square(x - mu), axis=-1, keepdims=True)
    return (x - mu) * jax.lax.rsqrt(var + LN_EPS) * g + b


def _gelu(x):
    # TODO(synk): tanh-approx GELU (HF BERT default is erf-GELU).
    c = math.sqrt(2.0 / math.pi)
    return 0.5 * x * (1.0 + jnp.tanh(c * (x + 0.044715 * x * x * x)))


# ----------------------------- single fused kernel -----------------------------
def fused_forward_kernel(
    ids_ref, mask_ref,
    we_ref, pe_ref, te_ref, eg_ref, eb_ref,
    wqkv_ref, bqkv_ref, wo_ref, bo_ref,
    g1_ref, be1_ref, w1_ref, bf1_ref, w2_ref, bf2_ref, g2_ref, be2_ref,
    wp_ref, bp_ref, wd_ref, bd_ref, wcls_ref, bcls_ref,
    out_ref,
):
    # ---- in-kernel word-embedding gather (ids in SMEM, table VMEM-resident) ----
    rows = [we_ref[pl.ds(ids_ref[b, s], 1), :] for b in range(B) for s in range(S)]
    we = jnp.concatenate(rows, axis=0)                                 # [B*S, H]

    # ---- embeddings add + LayerNorm, single [B*S, H] slab ----
    pe = jnp.concatenate([pe_ref[...]] * B, axis=0)                    # [B*S, H]
    x = _ln(we + pe + te_ref[...], eg_ref[...], eb_ref[...])           # [B*S, H] f32

    # ---- additive key-mask bias, hoisted once; (head, batch) einsum ordering ----
    key_bias = (1.0 - mask_ref[...].astype(jnp.float32)) * NEG_INF     # [B, S]
    mb = jnp.broadcast_to(key_bias.reshape(1, B, 1, S),
                          (NH, B, 1, S)).reshape(NH * B, 1, S)         # [NH*B, 1, S]

    # ---- transformer encoder layers (unrolled; all weights stay VMEM-resident) ----
    for l in range(LAYERS):
        # fused QKV: one [B*S,H] @ [H,3H] matmul (1/sqrt(DH) already folded into Wq)
        x_bf = x.astype(jnp.bfloat16)                                  # single cast site
        qkv = jnp.dot(x_bf, wqkv_ref[l],
                      preferred_element_type=jnp.float32) + bqkv_ref[l]
        qkv = qkv.astype(jnp.bfloat16).reshape(B, S, 3 * H)            # single cast site

        # head-batched operands: [NH*B, S, DH], batch index = h*B + b
        def slab(base):
            return jnp.concatenate(
                [qkv[:, :, base * H + h * DH: base * H + (h + 1) * DH]
                 for h in range(NH)], axis=0)
        q_hb, k_hb, v_hb = slab(0), slab(1), slab(2)

        s = jnp.einsum("bqd,bkd->bqk", q_hb, k_hb,
                       preferred_element_type=jnp.float32) + mb        # [NH*B, S, S]
        m = jnp.max(s, axis=-1, keepdims=True)
        e = jnp.exp(s - m)
        p = (e * pl.reciprocal(jnp.sum(e, axis=-1, keepdims=True), approx=True)
             ).astype(jnp.bfloat16)
        ctx = jnp.einsum("bqk,bkd->bqd", p, v_hb,
                         preferred_element_type=jnp.float32)           # [NH*B, S, DH]

        # concat heads back -> single output projection (accumulation stays in the MXU)
        ctx = jnp.concatenate([ctx[h * B:(h + 1) * B] for h in range(NH)], axis=-1)
        ctx = ctx.reshape(B * S, H).astype(jnp.bfloat16)               # single cast site
        attn = jnp.dot(ctx, wo_ref[l],
                       preferred_element_type=jnp.float32) + bo_ref[l]

        h1 = _ln(x + attn, g1_ref[l], be1_ref[l])                      # [B*S, H]

        ff = _gelu(jnp.dot(h1.astype(jnp.bfloat16), w1_ref[l],
                           preferred_element_type=jnp.float32) + bf1_ref[l])
        ff = jnp.dot(ff.astype(jnp.bfloat16), w2_ref[l],
                     preferred_element_type=jnp.float32) + bf2_ref[l]
        x = _ln(h1 + ff, g2_ref[l], be2_ref[l])

    # ---- pooler([CLS]) -> dropout -> deeplayer -> dropout -> output logits ----
    cls = x.reshape(B, S, H)[:, 0, :]                                  # [B, H]
    pooled = jnp.tanh(jnp.dot(cls.astype(jnp.bfloat16), wp_ref[...],
                              preferred_element_type=jnp.float32) + bp_ref[...])
    # TODO(synk): dropout1/dropout2 are identity (inference mode).
    hdeep = jnp.dot(pooled.astype(jnp.bfloat16), wd_ref[...],
                    preferred_element_type=jnp.float32) + bd_ref[...]
    out_ref[...] = jnp.dot(hdeep.astype(jnp.bfloat16), wcls_ref[...],
                           preferred_element_type=jnp.float32) + bcls_ref[...]


# ----------------------------- wrapper -----------------------------
def forward(params, input_ids, mask):
    args = (
        input_ids, mask,
        params["word_emb"], params["pos_emb"], params["type_emb"],
        params["emb_ln_g"], params["emb_ln_b"],
        params["wqkv"], params["bqkv"], params["wo"], params["bo"],
        params["ln1_g"], params["ln1_b"],
        params["w1"], params["b1"], params["w2"], params["b2"],
        params["ln2_g"], params["ln2_b"],
        params["pooler_w"], params["pooler_b"],
        params["deep_w"], params["deep_b"],
        params["out_w"], params["out_b"],
    )
    smem = pl.BlockSpec(memory_space=pltpu.MemorySpace.SMEM)
    vmem = pl.BlockSpec(memory_space=pltpu.MemorySpace.VMEM)
    in_specs = [smem] + [vmem] * (len(args) - 1)
    return pl.pallas_call(
        fused_forward_kernel,
        out_shape=jax.ShapeDtypeStruct((B, SENTIMENTS), jnp.float32),
        in_specs=in_specs,
        out_specs=vmem,
    )(*args)


# ----------------------------- deterministic parameter init -----------------------------
def init_params(key):
    def nrm(k, shape):
        return 0.02 * jax.random.normal(k, shape, dtype=jnp.float32)

    bf = jnp.bfloat16
    keys = iter(jax.random.split(key, 16))

    # fused QKV weight with the attention scale folded into the Q columns
    scale = 1.0 / math.sqrt(DH)
    wq = nrm(next(keys), (LAYERS, H, H)) * scale
    wk = nrm(next(keys), (LAYERS, H, H))
    wv = nrm(next(keys), (LAYERS, H, H))

    p = {
        "word_emb": nrm(next(keys), (VOCAB, H)),
        "pos_emb": nrm(next(keys), (S, H)),
        "type_emb": nrm(next(keys), (1, H)),
        "emb_ln_g": jnp.ones((1, H), jnp.float32),
        "emb_ln_b": jnp.zeros((1, H), jnp.float32),
        # stacked per-layer weights; matmul operands stored in bf16
        "wqkv": jnp.concatenate([wq, wk, wv], axis=-1).astype(bf),   # [L, H, 3H]
        "bqkv": jnp.zeros((LAYERS, 1, 3 * H), jnp.float32),
        "wo": nrm(next(keys), (LAYERS, H, H)).astype(bf),
        "bo": jnp.zeros((LAYERS, 1, H), jnp.float32),
        "ln1_g": jnp.ones((LAYERS, 1, H), jnp.float32),
        "ln1_b": jnp.zeros((LAYERS, 1, H), jnp.float32),
        "w1": nrm(next(keys), (LAYERS, H, INTER)).astype(bf),
        "b1": jnp.zeros((LAYERS, 1, INTER), jnp.float32),
        "w2": nrm(next(keys), (LAYERS, INTER, H)).astype(bf),
        "b2": jnp.zeros((LAYERS, 1, H), jnp.float32),
        "ln2_g": jnp.ones((LAYERS, 1, H), jnp.float32),
        "ln2_b": jnp.zeros((LAYERS, 1, H), jnp.float32),
        "pooler_w": nrm(next(keys), (H, H)).astype(bf),
        "pooler_b": jnp.zeros((1, H), jnp.float32),
        "deep_w": nrm(next(keys), (H, H)).astype(bf),
        "deep_b": jnp.zeros((1, H), jnp.float32),
        "out_w": nrm(next(keys), (H, SENTIMENTS)).astype(bf),
        "out_b": jnp.zeros((1, SENTIMENTS), jnp.float32),
    }
    return p


if __name__ == "__main__":
    key = jax.random.PRNGKey(0)
    k_param, k_ids = jax.random.split(key)
    params = init_params(k_param)

    input_ids = jax.random.randint(k_ids, (B, S), 0, VOCAB, dtype=jnp.int32)
    # attention mask: first batch full, second batch has last 3 tokens padded
    mask = jnp.array([[1] * S, [1] * (S - 3) + [0] * 3], dtype=jnp.int32)

    logits = jax.jit(forward)(params, input_ids, mask)
    jax.block_until_ready(logits)
    assert logits.shape == (B, SENTIMENTS)
    assert bool(jnp.all(jnp.isfinite(logits)))
    print("KERNEL_OK")
</pallas_src>

<mosaic_0001>
module attributes {stable_mosaic.version = 11 : i64} {
  func.func @fused_forward_kernel(%arg0: memref<2x8xi32, #tpu.memory_space<smem>>, %arg1: memref<2x8xi32, #tpu.memory_space<vmem>>, %arg2: memref<128x32xf32, #tpu.memory_space<vmem>>, %arg3: memref<8x32xf32, #tpu.memory_space<vmem>>, %arg4: memref<1x32xf32, #tpu.memory_space<vmem>>, %arg5: memref<1x32xf32, #tpu.memory_space<vmem>>, %arg6: memref<1x32xf32, #tpu.memory_space<vmem>>, %arg7: memref<2x32x96xbf16, #tpu.memory_space<vmem>>, %arg8: memref<2x1x96xf32, #tpu.memory_space<vmem>>, %arg9: memref<2x32x32xbf16, #tpu.memory_space<vmem>>, %arg10: memref<2x1x32xf32, #tpu.memory_space<vmem>>, %arg11: memref<2x1x32xf32, #tpu.memory_space<vmem>>, %arg12: memref<2x1x32xf32, #tpu.memory_space<vmem>>, %arg13: memref<2x32x64xbf16, #tpu.memory_space<vmem>>, %arg14: memref<2x1x64xf32, #tpu.memory_space<vmem>>, %arg15: memref<2x64x32xbf16, #tpu.memory_space<vmem>>, %arg16: memref<2x1x32xf32, #tpu.memory_space<vmem>>, %arg17: memref<2x1x32xf32, #tpu.memory_space<vmem>>, %arg18: memref<2x1x32xf32, #tpu.memory_space<vmem>>, %arg19: memref<32x32xbf16, #tpu.memory_space<vmem>>, %arg20: memref<1x32xf32, #tpu.memory_space<vmem>>, %arg21: memref<32x32xbf16, #tpu.memory_space<vmem>>, %arg22: memref<1x32xf32, #tpu.memory_space<vmem>>, %arg23: memref<32x3xbf16, #tpu.memory_space<vmem>>, %arg24: memref<1x3xf32, #tpu.memory_space<vmem>>, %arg25: memref<2x3xf32, #tpu.memory_space<vmem>>) attributes {dimension_semantics = [], scalar_prefetch = 0 : i64, scratch_operands = 0 : i64, tpu.core_type = #tpu.core_type<tc>} {
    %c0 = arith.constant 0 : index
    %c0_0 = arith.constant 0 : index
    %0 = memref.load %arg0[%c0, %c0_0] : memref<2x8xi32, #tpu.memory_space<smem>>
    %1 = arith.index_cast %0 : i32 to index
    %c0_1 = arith.constant 0 : index
    %2 = vector.load %arg2[%1, %c0_1] : memref<128x32xf32, #tpu.memory_space<vmem>>, vector<1x32xf32>
    %c0_2 = arith.constant 0 : index
    %c1 = arith.constant 1 : index
    %3 = memref.load %arg0[%c0_2, %c1] : memref<2x8xi32, #tpu.memory_space<smem>>
    %4 = arith.index_cast %3 : i32 to index
    %c0_3 = arith.constant 0 : index
    %5 = vector.load %arg2[%4, %c0_3] : memref<128x32xf32, #tpu.memory_space<vmem>>, vector<1x32xf32>
    %c0_4 = arith.constant 0 : index
    %c2 = arith.constant 2 : index
    %6 = memref.load %arg0[%c0_4, %c2] : memref<2x8xi32, #tpu.memory_space<smem>>
    %7 = arith.index_cast %6 : i32 to index
    %c0_5 = arith.constant 0 : index
    %8 = vector.load %arg2[%7, %c0_5] : memref<128x32xf32, #tpu.memory_space<vmem>>, vector<1x32xf32>
    %c0_6 = arith.constant 0 : index
    %c3 = arith.constant 3 : index
    %9 = memref.load %arg0[%c0_6, %c3] : memref<2x8xi32, #tpu.memory_space<smem>>
    %10 = arith.index_cast %9 : i32 to index
    %c0_7 = arith.constant 0 : index
    %11 = vector.load %arg2[%10, %c0_7] : memref<128x32xf32, #tpu.memory_space<vmem>>, vector<1x32xf32>
    %c0_8 = arith.constant 0 : index
    %c4 = arith.constant 4 : index
    %12 = memref.load %arg0[%c0_8, %c4] : memref<2x8xi32, #tpu.memory_space<smem>>
    %13 = arith.index_cast %12 : i32 to index
    %c0_9 = arith.constant 0 : index
    %14 = vector.load %arg2[%13, %c0_9] : memref<128x32xf32, #tpu.memory_space<vmem>>, vector<1x32xf32>
    %c0_10 = arith.constant 0 : index
    %c5 = arith.constant 5 : index
    %15 = memref.load %arg0[%c0_10, %c5] : memref<2x8xi32, #tpu.memory_space<smem>>
    %16 = arith.index_cast %15 : i32 to index
    %c0_11 = arith.constant 0 : index
    %17 = vector.load %arg2[%16, %c0_11] : memref<128x32xf32, #tpu.memory_space<vmem>>, vector<1x32xf32>
    %c0_12 = arith.constant 0 : index
    %c6 = arith.constant 6 : index
    %18 = memref.load %arg0[%c0_12, %c6] : memref<2x8xi32, #tpu.memory_space<smem>>
    %19 = arith.index_cast %18 : i32 to index
    %c0_13 = arith.constant 0 : index
    %20 = vector.load %arg2[%19, %c0_13] : memref<128x32xf32, #tpu.memory_space<vmem>>, vector<1x32xf32>
    %c0_14 = arith.constant 0 : index
    %c7 = arith.constant 7 : index
    %21 = memref.load %arg0[%c0_14, %c7] : memref<2x8xi32, #tpu.memory_space<smem>>
    %22 = arith.index_cast %21 : i32 to index
    %c0_15 = arith.constant 0 : index
    %23 = vector.load %arg2[%22, %c0_15] : memref<128x32xf32, #tpu.memory_space<vmem>>, vector<1x32xf32>
    %c1_16 = arith.constant 1 : index
    %c0_17 = arith.constant 0 : index
    %24 = memref.load %arg0[%c1_16, %c0_17] : memref<2x8xi32, #tpu.memory_space<smem>>
    %25 = arith.index_cast %24 : i32 to index
    %c0_18 = arith.constant 0 : index
    %26 = vector.load %arg2[%25, %c0_18] : memref<128x32xf32, #tpu.memory_space<vmem>>, vector<1x32xf32>
    %c1_19 = arith.constant 1 : index
    %c1_20 = arith.constant 1 : index
    %27 = memref.load %arg0[%c1_19, %c1_20] : memref<2x8xi32, #tpu.memory_space<smem>>
    %28 = arith.index_cast %27 : i32 to index
    %c0_21 = arith.constant 0 : index
    %29 = vector.load %arg2[%28, %c0_21] : memref<128x32xf32, #tpu.memory_space<vmem>>, vector<1x32xf32>
    %c1_22 = arith.constant 1 : index
    %c2_23 = arith.constant 2 : index
    %30 = memref.load %arg0[%c1_22, %c2_23] : memref<2x8xi32, #tpu.memory_space<smem>>
    %31 = arith.index_cast %30 : i32 to index
    %c0_24 = arith.constant 0 : index
    %32 = vector.load %arg2[%31, %c0_24] : memref<128x32xf32, #tpu.memory_space<vmem>>, vector<1x32xf32>
    %c1_25 = arith.constant 1 : index
    %c3_26 = arith.constant 3 : index
    %33 = memref.load %arg0[%c1_25, %c3_26] : memref<2x8xi32, #tpu.memory_space<smem>>
    %34 = arith.index_cast %33 : i32 to index
    %c0_27 = arith.constant 0 : index
    %35 = vector.load %arg2[%34, %c0_27] : memref<128x32xf32, #tpu.memory_space<vmem>>, vector<1x32xf32>
    %c1_28 = arith.constant 1 : index
    %c4_29 = arith.constant 4 : index
    %36 = memref.load %arg0[%c1_28, %c4_29] : memref<2x8xi32, #tpu.memory_space<smem>>
    %37 = arith.index_cast %36 : i32 to index
    %c0_30 = arith.constant 0 : index
    %38 = vector.load %arg2[%37, %c0_30] : memref<128x32xf32, #tpu.memory_space<vmem>>, vector<1x32xf32>
    %c1_31 = arith.constant 1 : index
    %c5_32 = arith.constant 5 : index
    %39 = memref.load %arg0[%c1_31, %c5_32] : memref<2x8xi32, #tpu.memory_space<smem>>
    %40 = arith.index_cast %39 : i32 to index
    %c0_33 = arith.constant 0 : index
    %41 = vector.load %arg2[%40, %c0_33] : memref<128x32xf32, #tpu.memory_space<vmem>>, vector<1x32xf32>
    %c1_34 = arith.constant 1 : index
    %c6_35 = arith.constant 6 : index
    %42 = memref.load %arg0[%c1_34, %c6_35] : memref<2x8xi32, #tpu.memory_space<smem>>
    %43 = arith.index_cast %42 : i32 to index
    %c0_36 = arith.constant 0 : index
    %44 = vector.load %arg2[%43, %c0_36] : memref<128x32xf32, #tpu.memory_space<vmem>>, vector<1x32xf32>
    %c1_37 = arith.constant 1 : index
    %c7_38 = arith.constant 7 : index
    %45 = memref.load %arg0[%c1_37, %c7_38] : memref<2x8xi32, #tpu.memory_space<smem>>
    %46 = arith.index_cast %45 : i32 to index
    %c0_39 = arith.constant 0 : index
    %47 = vector.load %arg2[%46, %c0_39] : memref<128x32xf32, #tpu.memory_space<vmem>>, vector<1x32xf32>
    %48 = tpu.concatenate %2, %5, %8, %11, %14, %17, %20, %23, %26, %29, %32, %35, %38, %41, %44, %47 in 0 : vector<1x32xf32>, vector<1x32xf32>, vector<1x32xf32>, vector<1x32xf32>, vector<1x32xf32>, vector<1x32xf32>, vector<1x32xf32>, vector<1x32xf32>, vector<1x32xf32>, vector<1x32xf32>, vector<1x32xf32>, vector<1x32xf32>, vector<1x32xf32>, vector<1x32xf32>, vector<1x32xf32>, vector<1x32xf32> -> vector<16x32xf32>
    %c0_40 = arith.constant 0 : index
    %c0_41 = arith.constant 0 : index
    %49 = vector.load %arg3[%c0_40, %c0_41] : memref<8x32xf32, #tpu.memory_space<vmem>>, vector<8x32xf32>
    %50 = tpu.concatenate %49, %49 in 0 : vector<8x32xf32>, vector<8x32xf32> -> vector<16x32xf32>
    %51 = arith.addf %48, %50 : vector<16x32xf32>
    %c0_42 = arith.constant 0 : index
    %c0_43 = arith.constant 0 : index
    %52 = vector.load %arg4[%c0_42, %c0_43] : memref<1x32xf32, #tpu.memory_space<vmem>>, vector<1x32xf32>
    %53 = vector.broadcast %52 : vector<1x32xf32> to vector<16x32xf32>
    %54 = arith.addf %51, %53 : vector<16x32xf32>
    %c0_44 = arith.constant 0 : index
    %c0_45 = arith.constant 0 : index
    %55 = vector.load %arg5[%c0_44, %c0_45] : memref<1x32xf32, #tpu.memory_space<vmem>>, vector<1x32xf32>
    %c0_46 = arith.constant 0 : index
    %c0_47 = arith.constant 0 : index
    %56 = vector.load %arg6[%c0_46, %c0_47] : memref<1x32xf32, #tpu.memory_space<vmem>>, vector<1x32xf32>
    %cst = arith.constant dense<0.000000e+00> : vector<16xf32>
    %57 = vector.multi_reduction <add>, %54, %cst [1] : vector<16x32xf32> to vector<16xf32>
    %58 = vector.shape_cast %57 : vector<16xf32> to vector<16x1xf32>
    %cst_48 = arith.constant 3.200000e+01 : f32
    %59 = vector.broadcast %cst_48 : f32 to vector<16x1xf32>
    %60 = arith.divf %58, %59 : vector<16x1xf32>
    %61 = vector.broadcast %60 : vector<16x1xf32> to vector<16x32xf32>
    %62 = arith.subf %54, %61 : vector<16x32xf32>
    %63 = arith.mulf %62, %62 : vector<16x32xf32>
    %cst_49 = arith.constant dense<0.000000e+00> : vector<16xf32>
    %64 = vector.multi_reduction <add>, %63, %cst_49 [1] : vector<16x32xf32> to vector<16xf32>
    %65 = vector.shape_cast %64 : vector<16xf32> to vector<16x1xf32>
    %cst_50 = arith.constant 3.200000e+01 : f32
    %66 = vector.broadcast %cst_50 : f32 to vector<16x1xf32>
    %67 = arith.divf %65, %66 : vector<16x1xf32>
    %68 = vector.broadcast %60 : vector<16x1xf32> to vector<16x32xf32>
    %69 = arith.subf %54, %68 : vector<16x32xf32>
    %cst_51 = arith.constant 9.99999996E-13 : f32
    %70 = vector.broadcast %cst_51 : f32 to vector<16x1xf32>
    %71 = arith.addf %67, %70 : vector<16x1xf32>
    %72 = math.rsqrt %71 : vector<16x1xf32>
    %73 = vector.broadcast %72 : vector<16x1xf32> to vector<16x32xf32>
    %74 = arith.mulf %69, %73 : vector<16x32xf32>
    %75 = vector.broadcast %55 : vector<1x32xf32> to vector<16x32xf32>
    %76 = arith.mulf %74, %75 : vector<16x32xf32>
    %77 = vector.broadcast %56 : vector<1x32xf32> to vector<16x32xf32>
    %78 = arith.addf %76, %77 : vector<16x32xf32>
    %c0_52 = arith.constant 0 : index
    %c0_53 = arith.constant 0 : index
    %79 = vector.load %arg1[%c0_52, %c0_53] : memref<2x8xi32, #tpu.memory_space<vmem>>, vector<2x8xi32>
    %80 = arith.sitofp %79 : vector<2x8xi32> to vector<2x8xf32>
    %cst_54 = arith.constant 1.000000e+00 : f32
    %81 = vector.broadcast %cst_54 : f32 to vector<2x8xf32>
    %82 = arith.subf %81, %80 : vector<2x8xf32>
    %cst_55 = arith.constant -1.000000e+09 : f32
    %83 = vector.broadcast %cst_55 : f32 to vector<2x8xf32>
    %84 = arith.mulf %82, %83 : vector<2x8xf32>
    %85 = vector.shape_cast %84 : vector<2x8xf32> to vector<1x2x1x8xf32>
    %86 = vector.shape_cast %85 : vector<1x2x1x8xf32> to vector<1x2x1x8xf32>
    %87 = vector.broadcast %86 : vector<1x2x1x8xf32> to vector<2x2x1x8xf32>
    %88 = vector.shape_cast %87 : vector<2x2x1x8xf32> to vector<4x1x8xf32>
    %89 = arith.truncf %78 : vector<16x32xf32> to vector<16x32xbf16>
    %c0_56 = arith.constant 0 : index
    %c0_57 = arith.constant 0 : index
    %c0_58 = arith.constant 0 : index
    %90 = vector.load %arg7[%c0_56, %c0_57, %c0_58] : memref<2x32x96xbf16, #tpu.memory_space<vmem>>, vector<1x32x96xbf16>
    %91 = vector.shape_cast %90 : vector<1x32x96xbf16> to vector<32x96xbf16>
    %cst_59 = arith.constant dense<0.000000e+00> : vector<16x96xf32>
    %92 = tpu.matmul %89, %91, %cst_59 {dimension_numbers = #tpu.dot_dimension_numbers<[1], [0], [0], [1], [0, 0, 1, 1], [], []>} : vector<16x32xbf16>, vector<32x96xbf16>, vector<16x96xf32> -> vector<16x96xf32>
    %c0_60 = arith.constant 0 : index
    %c0_61 = arith.constant 0 : index
    %c0_62 = arith.constant 0 : index
    %93 = vector.load %arg8[%c0_60, %c0_61, %c0_62] : memref<2x1x96xf32, #tpu.memory_space<vmem>>, vector<1x1x96xf32>
    %94 = vector.shape_cast %93 : vector<1x1x96xf32> to vector<1x96xf32>
    %95 = vector.broadcast %94 : vector<1x96xf32> to vector<16x96xf32>
    %96 = arith.addf %92, %95 : vector<16x96xf32>
    %97 = arith.truncf %96 : vector<16x96xf32> to vector<16x96xbf16>
    %98 = vector.shape_cast %97 : vector<16x96xbf16> to vector<2x8x96xbf16>
    %99 = vector.extract_strided_slice %98 {offsets = [0, 0, 0], sizes = [2, 8, 16], strides = [1, 1, 1]} : vector<2x8x96xbf16> to vector<2x8x16xbf16>
    %100 = vector.extract_strided_slice %98 {offsets = [0, 0, 16], sizes = [2, 8, 16], strides = [1, 1, 1]} : vector<2x8x96xbf16> to vector<2x8x16xbf16>
    %101 = tpu.concatenate %99, %100 in 0 : vector<2x8x16xbf16>, vector<2x8x16xbf16> -> vector<4x8x16xbf16>
    %102 = vector.extract_strided_slice %98 {offsets = [0, 0, 32], sizes = [2, 8, 16], strides = [1, 1, 1]} : vector<2x8x96xbf16> to vector<2x8x16xbf16>
    %103 = vector.extract_strided_slice %98 {offsets = [0, 0, 48], sizes = [2, 8, 16], strides = [1, 1, 1]} : vector<2x8x96xbf16> to vector<2x8x16xbf16>
    %104 = tpu.concatenate %102, %103 in 0 : vector<2x8x16xbf16>, vector<2x8x16xbf16> -> vector<4x8x16xbf16>
    %105 = vector.extract_strided_slice %98 {offsets = [0, 0, 64], sizes = [2, 8, 16], strides = [1, 1, 1]} : vector<2x8x96xbf16> to vector<2x8x16xbf16>
    %106 = vector.extract_strided_slice %98 {offsets = [0, 0, 80], sizes = [2, 8, 16], strides = [1, 1, 1]} : vector<2x8x96xbf16> to vector<2x8x16xbf16>
    %107 = tpu.concatenate %105, %106 in 0 : vector<2x8x16xbf16>, vector<2x8x16xbf16> -> vector<4x8x16xbf16>
    "tpu.trace_start"() <{level = 10 : i32, message = "bqd,bkd->bqk"}> : () -> ()
    %cst_63 = arith.constant dense<0.000000e+00> : vector<4x8x8xf32>
    %108 = tpu.matmul %101, %104, %cst_63 {dimension_numbers = #tpu.dot_dimension_numbers<[2], [2], [1], [1], [0, 0, 0, 1, 1, 1], [0], [0]>} : vector<4x8x16xbf16>, vector<4x8x16xbf16>, vector<4x8x8xf32> -> vector<4x8x8xf32>
    "tpu.trace_stop"() : () -> ()
    %109 = vector.broadcast %88 : vector<4x1x8xf32> to vector<4x8x8xf32>
    %110 = arith.addf %108, %109 : vector<4x8x8xf32>
    %cst_64 = arith.constant dense<0xFF800000> : vector<4x8xf32>
    %111 = vector.multi_reduction <maximumf>, %110, %cst_64 [2] : vector<4x8x8xf32> to vector<4x8xf32>
    %112 = vector.shape_cast %111 : vector<4x8xf32> to vector<4x8x1xf32>
    %113 = vector.broadcast %112 : vector<4x8x1xf32> to vector<4x8x8xf32>
    %114 = arith.subf %110, %113 : vector<4x8x8xf32>
    %115 = math.exp %114 : vector<4x8x8xf32>
    %cst_65 = arith.constant dense<0.000000e+00> : vector<4x8xf32>
    %116 = vector.multi_reduction <add>, %115, %cst_65 [2] : vector<4x8x8xf32> to vector<4x8xf32>
    %117 = vector.shape_cast %116 : vector<4x8xf32> to vector<4x8x1xf32>
    %118 = tpu.reciprocal %117 {approx = true} : vector<4x8x1xf32> -> vector<4x8x1xf32>
    %119 = vector.broadcast %118 : vector<4x8x1xf32> to vector<4x8x8xf32>
    %120 = arith.mulf %115, %119 : vector<4x8x8xf32>
    %121 = arith.truncf %120 : vector<4x8x8xf32> to vector<4x8x8xbf16>
    "tpu.trace_start"() <{level = 10 : i32, message = "bqk,bkd->bqd"}> : () -> ()
    %cst_66 = arith.constant dense<0.000000e+00> : vector<4x8x16xf32>
    %122 = tpu.matmul %121, %107, %cst_66 {dimension_numbers = #tpu.dot_dimension_numbers<[2], [1], [1], [2], [0, 0, 0, 1, 1, 2], [0], [0]>} : vector<4x8x8xbf16>, vector<4x8x16xbf16>, vector<4x8x16xf32> -> vector<4x8x16xf32>
    "tpu.trace_stop"() : () -> ()
    %123 = vector.extract_strided_slice %122 {offsets = [0, 0, 0], sizes = [2, 8, 16], strides = [1, 1, 1]} : vector<4x8x16xf32> to vector<2x8x16xf32>
    %124 = vector.extract_strided_slice %122 {offsets = [2, 0, 0], sizes = [2, 8, 16], strides = [1, 1, 1]} : vector<4x8x16xf32> to vector<2x8x16xf32>
    %125 = tpu.concatenate %123, %124 in 2 : vector<2x8x16xf32>, vector<2x8x16xf32> -> vector<2x8x32xf32>
    %126 = vector.shape_cast %125 : vector<2x8x32xf32> to vector<16x32xf32>
    %127 = arith.truncf %126 : vector<16x32xf32> to vector<16x32xbf16>
    %c0_67 = arith.constant 0 : index
    %c0_68 = arith.constant 0 : index
    %c0_69 = arith.constant 0 : index
    %128 = vector.load %arg9[%c0_67, %c0_68, %c0_69] : memref<2x32x32xbf16, #tpu.memory_space<vmem>>, vector<1x32x32xbf16>
    %129 = vector.shape_cast %128 : vector<1x32x32xbf16> to vector<32x32xbf16>
    %cst_70 = arith.constant dense<0.000000e+00> : vector<16x32xf32>
    %130 = tpu.matmul %127, %129, %cst_70 {dimension_numbers = #tpu.dot_dimension_numbers<[1], [0], [0], [1], [0, 0, 1, 1], [], []>} : vector<16x32xbf16>, vector<32x32xbf16>, vector<16x32xf32> -> vector<16x32xf32>
    %c0_71 = arith.constant 0 : index
    %c0_72 = arith.constant 0 : index
    %c0_73 = arith.constant 0 : index
    %131 = vector.load %arg10[%c0_71, %c0_72, %c0_73] : memref<2x1x32xf32, #tpu.memory_space<vmem>>, vector<1x1x32xf32>
    %132 = vector.shape_cast %131 : vector<1x1x32xf32> to vector<1x32xf32>
    %133 = vector.broadcast %132 : vector<1x32xf32> to vector<16x32xf32>
    %134 = arith.addf %130, %133 : vector<16x32xf32>
    %135 = arith.addf %78, %134 : vector<16x32xf32>
    %c0_74 = arith.constant 0 : index
    %c0_75 = arith.constant 0 : index
    %c0_76 = arith.constant 0 : index
    %136 = vector.load %arg11[%c0_74, %c0_75, %c0_76] : memref<2x1x32xf32, #tpu.memory_space<vmem>>, vector<1x1x32xf32>
    %137 = vector.shape_cast %136 : vector<1x1x32xf32> to vector<1x32xf32>
    %c0_77 = arith.constant 0 : index
    %c0_78 = arith.constant 0 : index
    %c0_79 = arith.constant 0 : index
    %138 = vector.load %arg12[%c0_77, %c0_78, %c0_79] : memref<2x1x32xf32, #tpu.memory_space<vmem>>, vector<1x1x32xf32>
    %139 = vector.shape_cast %138 : vector<1x1x32xf32> to vector<1x32xf32>
    %cst_80 = arith.constant dense<0.000000e+00> : vector<16xf32>
    %140 = vector.multi_reduction <add>, %135, %cst_80 [1] : vector<16x32xf32> to vector<16xf32>
    %141 = vector.shape_cast %140 : vector<16xf32> to vector<16x1xf32>
    %cst_81 = arith.constant 3.200000e+01 : f32
    %142 = vector.broadcast %cst_81 : f32 to vector<16x1xf32>
    %143 = arith.divf %141, %142 : vector<16x1xf32>
    %144 = vector.broadcast %143 : vector<16x1xf32> to vector<16x32xf32>
    %145 = arith.subf %135, %144 : vector<16x32xf32>
    %146 = arith.mulf %145, %145 : vector<16x32xf32>
    %cst_82 = arith.constant dense<0.000000e+00> : vector<16xf32>
    %147 = vector.multi_reduction <add>, %146, %cst_82 [1] : vector<16x32xf32> to vector<16xf32>
    %148 = vector.shape_cast %147 : vector<16xf32> to vector<16x1xf32>
    %cst_83 = arith.constant 3.200000e+01 : f32
    %149 = vector.broadcast %cst_83 : f32 to vector<16x1xf32>
    %150 = arith.divf %148, %149 : vector<16x1xf32>
    %151 = vector.broadcast %143 : vector<16x1xf32> to vector<16x32xf32>
    %152 = arith.subf %135, %151 : vector<16x32xf32>
    %cst_84 = arith.constant 9.99999996E-13 : f32
    %153 = vector.broadcast %cst_84 : f32 to vector<16x1xf32>
    %154 = arith.addf %150, %153 : vector<16x1xf32>
    %155 = math.rsqrt %154 : vector<16x1xf32>
    %156 = vector.broadcast %155 : vector<16x1xf32> to vector<16x32xf32>
    %157 = arith.mulf %152, %156 : vector<16x32xf32>
    %158 = vector.broadcast %137 : vector<1x32xf32> to vector<16x32xf32>
    %159 = arith.mulf %157, %158 : vector<16x32xf32>
    %160 = vector.broadcast %139 : vector<1x32xf32> to vector<16x32xf32>
    %161 = arith.addf %159, %160 : vector<16x32xf32>
    %162 = arith.truncf %161 : vector<16x32xf32> to vector<16x32xbf16>
    %c0_85 = arith.constant 0 : index
    %c0_86 = arith.constant 0 : index
    %c0_87 = arith.constant 0 : index
    %163 = vector.load %arg13[%c0_85, %c0_86, %c0_87] : memref<2x32x64xbf16, #tpu.memory_space<vmem>>, vector<1x32x64xbf16>
    %164 = vector.shape_cast %163 : vector<1x32x64xbf16> to vector<32x64xbf16>
    %cst_88 = arith.constant dense<0.000000e+00> : vector<16x64xf32>
    %165 = tpu.matmul %162, %164, %cst_88 {dimension_numbers = #tpu.dot_dimension_numbers<[1], [0], [0], [1], [0, 0, 1, 1], [], []>} : vector<16x32xbf16>, vector<32x64xbf16>, vector<16x64xf32> -> vector<16x64xf32>
    %c0_89 = arith.constant 0 : index
    %c0_90 = arith.constant 0 : index
    %c0_91 = arith.constant 0 : index
    %166 = vector.load %arg14[%c0_89, %c0_90, %c0_91] : memref<2x1x64xf32, #tpu.memory_space<vmem>>, vector<1x1x64xf32>
    %167 = vector.shape_cast %166 : vector<1x1x64xf32> to vector<1x64xf32>
    %168 = vector.broadcast %167 : vector<1x64xf32> to vector<16x64xf32>
    %169 = arith.addf %165, %168 : vector<16x64xf32>
    %cst_92 = arith.constant 5.000000e-01 : f32
    %170 = vector.broadcast %cst_92 : f32 to vector<16x64xf32>
    %171 = arith.mulf %170, %169 : vector<16x64xf32>
    %cst_93 = arith.constant 4.471500e-02 : f32
    %172 = vector.broadcast %cst_93 : f32 to vector<16x64xf32>
    %173 = arith.mulf %172, %169 : vector<16x64xf32>
    %174 = arith.mulf %173, %169 : vector<16x64xf32>
    %175 = arith.mulf %174, %169 : vector<16x64xf32>
    %176 = arith.addf %169, %175 : vector<16x64xf32>
    %cst_94 = arith.constant 0.797884583 : f32
    %177 = vector.broadcast %cst_94 : f32 to vector<16x64xf32>
    %178 = arith.mulf %177, %176 : vector<16x64xf32>
    %179 = math.tanh %178 : vector<16x64xf32>
    %cst_95 = arith.constant 1.000000e+00 : f32
    %180 = vector.broadcast %cst_95 : f32 to vector<16x64xf32>
    %181 = arith.addf %180, %179 : vector<16x64xf32>
    %182 = arith.mulf %171, %181 : vector<16x64xf32>
    %183 = arith.truncf %182 : vector<16x64xf32> to vector<16x64xbf16>
    %c0_96 = arith.constant 0 : index
    %c0_97 = arith.constant 0 : index
    %c0_98 = arith.constant 0 : index
    %184 = vector.load %arg15[%c0_96, %c0_97, %c0_98] : memref<2x64x32xbf16, #tpu.memory_space<vmem>>, vector<1x64x32xbf16>
    %185 = vector.shape_cast %184 : vector<1x64x32xbf16> to vector<64x32xbf16>
    %cst_99 = arith.constant dense<0.000000e+00> : vector<16x32xf32>
    %186 = tpu.matmul %183, %185, %cst_99 {dimension_numbers = #tpu.dot_dimension_numbers<[1], [0], [0], [1], [0, 0, 1, 1], [], []>} : vector<16x64xbf16>, vector<64x32xbf16>, vector<16x32xf32> -> vector<16x32xf32>
    %c0_100 = arith.constant 0 : index
    %c0_101 = arith.constant 0 : index
    %c0_102 = arith.constant 0 : index
    %187 = vector.load %arg16[%c0_100, %c0_101, %c0_102] : memref<2x1x32xf32, #tpu.memory_space<vmem>>, vector<1x1x32xf32>
    %188 = vector.shape_cast %187 : vector<1x1x32xf32> to vector<1x32xf32>
    %189 = vector.broadcast %188 : vector<1x32xf32> to vector<16x32xf32>
    %190 = arith.addf %186, %189 : vector<16x32xf32>
    %191 = arith.addf %161, %190 : vector<16x32xf32>
    %c0_103 = arith.constant 0 : index
    %c0_104 = arith.constant 0 : index
    %c0_105 = arith.constant 0 : index
    %192 = vector.load %arg17[%c0_103, %c0_104, %c0_105] : memref<2x1x32xf32, #tpu.memory_space<vmem>>, vector<1x1x32xf32>
    %193 = vector.shape_cast %192 : vector<1x1x32xf32> to vector<1x32xf32>
    %c0_106 = arith.constant 0 : index
    %c0_107 = arith.constant 0 : index
    %c0_108 = arith.constant 0 : index
    %194 = vector.load %arg18[%c0_106, %c0_107, %c0_108] : memref<2x1x32xf32, #tpu.memory_space<vmem>>, vector<1x1x32xf32>
    %195 = vector.shape_cast %194 : vector<1x1x32xf32> to vector<1x32xf32>
    %cst_109 = arith.constant dense<0.000000e+00> : vector<16xf32>
    %196 = vector.multi_reduction <add>, %191, %cst_109 [1] : vector<16x32xf32> to vector<16xf32>
    %197 = vector.shape_cast %196 : vector<16xf32> to vector<16x1xf32>
    %cst_110 = arith.constant 3.200000e+01 : f32
    %198 = vector.broadcast %cst_110 : f32 to vector<16x1xf32>
    %199 = arith.divf %197, %198 : vector<16x1xf32>
    %200 = vector.broadcast %199 : vector<16x1xf32> to vector<16x32xf32>
    %201 = arith.subf %191, %200 : vector<16x32xf32>
    %202 = arith.mulf %201, %201 : vector<16x32xf32>
    %cst_111 = arith.constant dense<0.000000e+00> : vector<16xf32>
    %203 = vector.multi_reduction <add>, %202, %cst_111 [1] : vector<16x32xf32> to vector<16xf32>
    %204 = vector.shape_cast %203 : vector<16xf32> to vector<16x1xf32>
    %cst_112 = arith.constant 3.200000e+01 : f32
    %205 = vector.broadcast %cst_112 : f32 to vector<16x1xf32>
    %206 = arith.divf %204, %205 : vector<16x1xf32>
    %207 = vector.broadcast %199 : vector<16x1xf32> to vector<16x32xf32>
    %208 = arith.subf %191, %207 : vector<16x32xf32>
    %cst_113 = arith.constant 9.99999996E-13 : f32
    %209 = vector.broadcast %cst_113 : f32 to vector<16x1xf32>
    %210 = arith.addf %206, %209 : vector<16x1xf32>
    %211 = math.rsqrt %210 : vector<16x1xf32>
    %212 = vector.broadcast %211 : vector<16x1xf32> to vector<16x32xf32>
    %213 = arith.mulf %208, %212 : vector<16x32xf32>
    %214 = vector.broadcast %193 : vector<1x32xf32> to vector<16x32xf32>
    %215 = arith.mulf %213, %214 : vector<16x32xf32>
    %216 = vector.broadcast %195 : vector<1x32xf32> to vector<16x32xf32>
    %217 = arith.addf %215, %216 : vector<16x32xf32>
    %218 = arith.truncf %217 : vector<16x32xf32> to vector<16x32xbf16>
    %c1_114 = arith.constant 1 : index
    %c0_115 = arith.constant 0 : index
    %c0_116 = arith.constant 0 : index
    %219 = vector.load %arg7[%c1_114, %c0_115, %c0_116] : memref<2x32x96xbf16, #tpu.memory_space<vmem>>, vector<1x32x96xbf16>
    %220 = vector.shape_cast %219 : vector<1x32x96xbf16> to vector<32x96xbf16>
    %cst_117 = arith.constant dense<0.000000e+00> : vector<16x96xf32>
    %221 = tpu.matmul %218, %220, %cst_117 {dimension_numbers = #tpu.dot_dimension_numbers<[1], [0], [0], [1], [0, 0, 1, 1], [], []>} : vector<16x32xbf16>, vector<32x96xbf16>, vector<16x96xf32> -> vector<16x96xf32>
    %c1_118 = arith.constant 1 : index
    %c0_119 = arith.constant 0 : index
    %c0_120 = arith.constant 0 : index
    %222 = vector.load %arg8[%c1_118, %c0_119, %c0_120] : memref<2x1x96xf32, #tpu.memory_space<vmem>>, vector<1x1x96xf32>
    %223 = vector.shape_cast %222 : vector<1x1x96xf32> to vector<1x96xf32>
    %224 = vector.broadcast %223 : vector<1x96xf32> to vector<16x96xf32>
    %225 = arith.addf %221, %224 : vector<16x96xf32>
    %226 = arith.truncf %225 : vector<16x96xf32> to vector<16x96xbf16>
    %227 = vector.shape_cast %226 : vector<16x96xbf16> to vector<2x8x96xbf16>
    %228 = vector.extract_strided_slice %227 {offsets = [0, 0, 0], sizes = [2, 8, 16], strides = [1, 1, 1]} : vector<2x8x96xbf16> to vector<2x8x16xbf16>
    %229 = vector.extract_strided_slice %227 {offsets = [0, 0, 16], sizes = [2, 8, 16], strides = [1, 1, 1]} : vector<2x8x96xbf16> to vector<2x8x16xbf16>
    %230 = tpu.concatenate %228, %229 in 0 : vector<2x8x16xbf16>, vector<2x8x16xbf16> -> vector<4x8x16xbf16>
    %231 = vector.extract_strided_slice %227 {offsets = [0, 0, 32], sizes = [2, 8, 16], strides = [1, 1, 1]} : vector<2x8x96xbf16> to vector<2x8x16xbf16>
    %232 = vector.extract_strided_slice %227 {offsets = [0, 0, 48], sizes = [2, 8, 16], strides = [1, 1, 1]} : vector<2x8x96xbf16> to vector<2x8x16xbf16>
    %233 = tpu.concatenate %231, %232 in 0 : vector<2x8x16xbf16>, vector<2x8x16xbf16> -> vector<4x8x16xbf16>
    %234 = vector.extract_strided_slice %227 {offsets = [0, 0, 64], sizes = [2, 8, 16], strides = [1, 1, 1]} : vector<2x8x96xbf16> to vector<2x8x16xbf16>
    %235 = vector.extract_strided_slice %227 {offsets = [0, 0, 80], sizes = [2, 8, 16], strides = [1, 1, 1]} : vector<2x8x96xbf16> to vector<2x8x16xbf16>
    %236 = tpu.concatenate %234, %235 in 0 : vector<2x8x16xbf16>, vector<2x8x16xbf16> -> vector<4x8x16xbf16>
    "tpu.trace_start"() <{level = 10 : i32, message = "bqd,bkd->bqk"}> : () -> ()
    %cst_121 = arith.constant dense<0.000000e+00> : vector<4x8x8xf32>
    %237 = tpu.matmul %230, %233, %cst_121 {dimension_numbers = #tpu.dot_dimension_numbers<[2], [2], [1], [1], [0, 0, 0, 1, 1, 1], [0], [0]>} : vector<4x8x16xbf16>, vector<4x8x16xbf16>, vector<4x8x8xf32> -> vector<4x8x8xf32>
    "tpu.trace_stop"() : () -> ()
    %238 = vector.broadcast %88 : vector<4x1x8xf32> to vector<4x8x8xf32>
    %239 = arith.addf %237, %238 : vector<4x8x8xf32>
    %cst_122 = arith.constant dense<0xFF800000> : vector<4x8xf32>
    %240 = vector.multi_reduction <maximumf>, %239, %cst_122 [2] : vector<4x8x8xf32> to vector<4x8xf32>
    %241 = vector.shape_cast %240 : vector<4x8xf32> to vector<4x8x1xf32>
    %242 = vector.broadcast %241 : vector<4x8x1xf32> to vector<4x8x8xf32>
    %243 = arith.subf %239, %242 : vector<4x8x8xf32>
    %244 = math.exp %243 : vector<4x8x8xf32>
    %cst_123 = arith.constant dense<0.000000e+00> : vector<4x8xf32>
    %245 = vector.multi_reduction <add>, %244, %cst_123 [2] : vector<4x8x8xf32> to vector<4x8xf32>
    %246 = vector.shape_cast %245 : vector<4x8xf32> to vector<4x8x1xf32>
    %247 = tpu.reciprocal %246 {approx = true} : vector<4x8x1xf32> -> vector<4x8x1xf32>
    %248 = vector.broadcast %247 : vector<4x8x1xf32> to vector<4x8x8xf32>
    %249 = arith.mulf %244, %248 : vector<4x8x8xf32>
    %250 = arith.truncf %249 : vector<4x8x8xf32> to vector<4x8x8xbf16>
    "tpu.trace_start"() <{level = 10 : i32, message = "bqk,bkd->bqd"}> : () -> ()
    %cst_124 = arith.constant dense<0.000000e+00> : vector<4x8x16xf32>
    %251 = tpu.matmul %250, %236, %cst_124 {dimension_numbers = #tpu.dot_dimension_numbers<[2], [1], [1], [2], [0, 0, 0, 1, 1, 2], [0], [0]>} : vector<4x8x8xbf16>, vector<4x8x16xbf16>, vector<4x8x16xf32> -> vector<4x8x16xf32>
    "tpu.trace_stop"() : () -> ()
    %252 = vector.extract_strided_slice %251 {offsets = [0, 0, 0], sizes = [2, 8, 16], strides = [1, 1, 1]} : vector<4x8x16xf32> to vector<2x8x16xf32>
    %253 = vector.extract_strided_slice %251 {offsets = [2, 0, 0], sizes = [2, 8, 16], strides = [1, 1, 1]} : vector<4x8x16xf32> to vector<2x8x16xf32>
    %254 = tpu.concatenate %252, %253 in 2 : vector<2x8x16xf32>, vector<2x8x16xf32> -> vector<2x8x32xf32>
    %255 = vector.shape_cast %254 : vector<2x8x32xf32> to vector<16x32xf32>
    %256 = arith.truncf %255 : vector<16x32xf32> to vector<16x32xbf16>
    %c1_125 = arith.constant 1 : index
    %c0_126 = arith.constant 0 : index
    %c0_127 = arith.constant 0 : index
    %257 = vector.load %arg9[%c1_125, %c0_126, %c0_127] : memref<2x32x32xbf16, #tpu.memory_space<vmem>>, vector<1x32x32xbf16>
    %258 = vector.shape_cast %257 : vector<1x32x32xbf16> to vector<32x32xbf16>
    %cst_128 = arith.constant dense<0.000000e+00> : vector<16x32xf32>
    %259 = tpu.matmul %256, %258, %cst_128 {dimension_numbers = #tpu.dot_dimension_numbers<[1], [0], [0], [1], [0, 0, 1, 1], [], []>} : vector<16x32xbf16>, vector<32x32xbf16>, vector<16x32xf32> -> vector<16x32xf32>
    %c1_129 = arith.constant 1 : index
    %c0_130 = arith.constant 0 : index
    %c0_131 = arith.constant 0 : index
    %260 = vector.load %arg10[%c1_129, %c0_130, %c0_131] : memref<2x1x32xf32, #tpu.memory_space<vmem>>, vector<1x1x32xf32>
    %261 = vector.shape_cast %260 : vector<1x1x32xf32> to vector<1x32xf32>
    %262 = vector.broadcast %261 : vector<1x32xf32> to vector<16x32xf32>
    %263 = arith.addf %259, %262 : vector<16x32xf32>
    %264 = arith.addf %217, %263 : vector<16x32xf32>
    %c1_132 = arith.constant 1 : index
    %c0_133 = arith.constant 0 : index
    %c0_134 = arith.constant 0 : index
    %265 = vector.load %arg11[%c1_132, %c0_133, %c0_134] : memref<2x1x32xf32, #tpu.memory_space<vmem>>, vector<1x1x32xf32>
    %266 = vector.shape_cast %265 : vector<1x1x32xf32> to vector<1x32xf32>
    %c1_135 = arith.constant 1 : index
    %c0_136 = arith.constant 0 : index
    %c0_137 = arith.constant 0 : index
    %267 = vector.load %arg12[%c1_135, %c0_136, %c0_137] : memref<2x1x32xf32, #tpu.memory_space<vmem>>, vector<1x1x32xf32>
    %268 = vector.shape_cast %267 : vector<1x1x32xf32> to vector<1x32xf32>
    %cst_138 = arith.constant dense<0.000000e+00> : vector<16xf32>
    %269 = vector.multi_reduction <add>, %264, %cst_138 [1] : vector<16x32xf32> to vector<16xf32>
    %270 = vector.shape_cast %269 : vector<16xf32> to vector<16x1xf32>
    %cst_139 = arith.constant 3.200000e+01 : f32
    %271 = vector.broadcast %cst_139 : f32 to vector<16x1xf32>
    %272 = arith.divf %270, %271 : vector<16x1xf32>
    %273 = vector.broadcast %272 : vector<16x1xf32> to vector<16x32xf32>
    %274 = arith.subf %264, %273 : vector<16x32xf32>
    %275 = arith.mulf %274, %274 : vector<16x32xf32>
    %cst_140 = arith.constant dense<0.000000e+00> : vector<16xf32>
    %276 = vector.multi_reduction <add>, %275, %cst_140 [1] : vector<16x32xf32> to vector<16xf32>
    %277 = vector.shape_cast %276 : vector<16xf32> to vector<16x1xf32>
    %cst_141 = arith.constant 3.200000e+01 : f32
    %278 = vector.broadcast %cst_141 : f32 to vector<16x1xf32>
    %279 = arith.divf %277, %278 : vector<16x1xf32>
    %280 = vector.broadcast %272 : vector<16x1xf32> to vector<16x32xf32>
    %281 = arith.subf %264, %280 : vector<16x32xf32>
    %cst_142 = arith.constant 9.99999996E-13 : f32
    %282 = vector.broadcast %cst_142 : f32 to vector<16x1xf32>
    %283 = arith.addf %279, %282 : vector<16x1xf32>
    %284 = math.rsqrt %283 : vector<16x1xf32>
    %285 = vector.broadcast %284 : vector<16x1xf32> to vector<16x32xf32>
    %286 = arith.mulf %281, %285 : vector<16x32xf32>
    %287 = vector.broadcast %266 : vector<1x32xf32> to vector<16x32xf32>
    %288 = arith.mulf %286, %287 : vector<16x32xf32>
    %289 = vector.broadcast %268 : vector<1x32xf32> to vector<16x32xf32>
    %290 = arith.addf %288, %289 : vector<16x32xf32>
    %291 = arith.truncf %290 : vector<16x32xf32> to vector<16x32xbf16>
    %c1_143 = arith.constant 1 : index
    %c0_144 = arith.constant 0 : index
    %c0_145 = arith.constant 0 : index
    %292 = vector.load %arg13[%c1_143, %c0_144, %c0_145] : memref<2x32x64xbf16, #tpu.memory_space<vmem>>, vector<1x32x64xbf16>
    %293 = vector.shape_cast %292 : vector<1x32x64xbf16> to vector<32x64xbf16>
    %cst_146 = arith.constant dense<0.000000e+00> : vector<16x64xf32>
    %294 = tpu.matmul %291, %293, %cst_146 {dimension_numbers = #tpu.dot_dimension_numbers<[1], [0], [0], [1], [0, 0, 1, 1], [], []>} : vector<16x32xbf16>, vector<32x64xbf16>, vector<16x64xf32> -> vector<16x64xf32>
    %c1_147 = arith.constant 1 : index
    %c0_148 = arith.constant 0 : index
    %c0_149 = arith.constant 0 : index
    %295 = vector.load %arg14[%c1_147, %c0_148, %c0_149] : memref<2x1x64xf32, #tpu.memory_space<vmem>>, vector<1x1x64xf32>
    %296 = vector.shape_cast %295 : vector<1x1x64xf32> to vector<1x64xf32>
    %297 = vector.broadcast %296 : vector<1x64xf32> to vector<16x64xf32>
    %298 = arith.addf %294, %297 : vector<16x64xf32>
    %cst_150 = arith.constant 5.000000e-01 : f32
    %299 = vector.broadcast %cst_150 : f32 to vector<16x64xf32>
    %300 = arith.mulf %299, %298 : vector<16x64xf32>
    %cst_151 = arith.constant 4.471500e-02 : f32
    %301 = vector.broadcast %cst_151 : f32 to vector<16x64xf32>
    %302 = arith.mulf %301, %298 : vector<16x64xf32>
    %303 = arith.mulf %302, %298 : vector<16x64xf32>
    %304 = arith.mulf %303, %298 : vector<16x64xf32>
    %305 = arith.addf %298, %304 : vector<16x64xf32>
    %cst_152 = arith.constant 0.797884583 : f32
    %306 = vector.broadcast %cst_152 : f32 to vector<16x64xf32>
    %307 = arith.mulf %306, %305 : vector<16x64xf32>
    %308 = math.tanh %307 : vector<16x64xf32>
    %cst_153 = arith.constant 1.000000e+00 : f32
    %309 = vector.broadcast %cst_153 : f32 to vector<16x64xf32>
    %310 = arith.addf %309, %308 : vector<16x64xf32>
    %311 = arith.mulf %300, %310 : vector<16x64xf32>
    %312 = arith.truncf %311 : vector<16x64xf32> to vector<16x64xbf16>
    %c1_154 = arith.constant 1 : index
    %c0_155 = arith.constant 0 : index
    %c0_156 = arith.constant 0 : index
    %313 = vector.load %arg15[%c1_154, %c0_155, %c0_156] : memref<2x64x32xbf16, #tpu.memory_space<vmem>>, vector<1x64x32xbf16>
    %314 = vector.shape_cast %313 : vector<1x64x32xbf16> to vector<64x32xbf16>
    %cst_157 = arith.constant dense<0.000000e+00> : vector<16x32xf32>
    %315 = tpu.matmul %312, %314, %cst_157 {dimension_numbers = #tpu.dot_dimension_numbers<[1], [0], [0], [1], [0, 0, 1, 1], [], []>} : vector<16x64xbf16>, vector<64x32xbf16>, vector<16x32xf32> -> vector<16x32xf32>
    %c1_158 = arith.constant 1 : index
    %c0_159 = arith.constant 0 : index
    %c0_160 = arith.constant 0 : index
    %316 = vector.load %arg16[%c1_158, %c0_159, %c0_160] : memref<2x1x32xf32, #tpu.memory_space<vmem>>, vector<1x1x32xf32>
    %317 = vector.shape_cast %316 : vector<1x1x32xf32> to vector<1x32xf32>
    %318 = vector.broadcast %317 : vector<1x32xf32> to vector<16x32xf32>
    %319 = arith.addf %315, %318 : vector<16x32xf32>
    %320 = arith.addf %290, %319 : vector<16x32xf32>
    %c1_161 = arith.constant 1 : index
    %c0_162 = arith.constant 0 : index
    %c0_163 = arith.constant 0 : index
    %321 = vector.load %arg17[%c1_161, %c0_162, %c0_163] : memref<2x1x32xf32, #tpu.memory_space<vmem>>, vector<1x1x32xf32>
    %322 = vector.shape_cast %321 : vector<1x1x32xf32> to vector<1x32xf32>
    %c1_164 = arith.constant 1 : index
    %c0_165 = arith.constant 0 : index
    %c0_166 = arith.constant 0 : index
    %323 = vector.load %arg18[%c1_164, %c0_165, %c0_166] : memref<2x1x32xf32, #tpu.memory_space<vmem>>, vector<1x1x32xf32>
    %324 = vector.shape_cast %323 : vector<1x1x32xf32> to vector<1x32xf32>
    %cst_167 = arith.constant dense<0.000000e+00> : vector<16xf32>
    %325 = vector.multi_reduction <add>, %320, %cst_167 [1] : vector<16x32xf32> to vector<16xf32>
    %326 = vector.shape_cast %325 : vector<16xf32> to vector<16x1xf32>
    %cst_168 = arith.constant 3.200000e+01 : f32
    %327 = vector.broadcast %cst_168 : f32 to vector<16x1xf32>
    %328 = arith.divf %326, %327 : vector<16x1xf32>
    %329 = vector.broadcast %328 : vector<16x1xf32> to vector<16x32xf32>
    %330 = arith.subf %320, %329 : vector<16x32xf32>
    %331 = arith.mulf %330, %330 : vector<16x32xf32>
    %cst_169 = arith.constant dense<0.000000e+00> : vector<16xf32>
    %332 = vector.multi_reduction <add>, %331, %cst_169 [1] : vector<16x32xf32> to vector<16xf32>
    %333 = vector.shape_cast %332 : vector<16xf32> to vector<16x1xf32>
    %cst_170 = arith.constant 3.200000e+01 : f32
    %334 = vector.broadcast %cst_170 : f32 to vector<16x1xf32>
    %335 = arith.divf %333, %334 : vector<16x1xf32>
    %336 = vector.broadcast %328 : vector<16x1xf32> to vector<16x32xf32>
    %337 = arith.subf %320, %336 : vector<16x32xf32>
    %cst_171 = arith.constant 9.99999996E-13 : f32
    %338 = vector.broadcast %cst_171 : f32 to vector<16x1xf32>
    %339 = arith.addf %335, %338 : vector<16x1xf32>
    %340 = math.rsqrt %339 : vector<16x1xf32>
    %341 = vector.broadcast %340 : vector<16x1xf32> to vector<16x32xf32>
    %342 = arith.mulf %337, %341 : vector<16x32xf32>
    %343 = vector.broadcast %322 : vector<1x32xf32> to vector<16x32xf32>
    %344 = arith.mulf %342, %343 : vector<16x32xf32>
    %345 = vector.broadcast %324 : vector<1x32xf32> to vector<16x32xf32>
    %346 = arith.addf %344, %345 : vector<16x32xf32>
    %347 = vector.shape_cast %346 : vector<16x32xf32> to vector<2x8x32xf32>
    %348 = vector.extract_strided_slice %347 {offsets = [0, 0, 0], sizes = [2, 1, 32], strides = [1, 1, 1]} : vector<2x8x32xf32> to vector<2x1x32xf32>
    %349 = vector.shape_cast %348 : vector<2x1x32xf32> to vector<2x32xf32>
    %350 = arith.truncf %349 : vector<2x32xf32> to vector<2x32xbf16>
    %c0_172 = arith.constant 0 : index
    %c0_173 = arith.constant 0 : index
    %351 = vector.load %arg19[%c0_172, %c0_173] : memref<32x32xbf16, #tpu.memory_space<vmem>>, vector<32x32xbf16>
    %cst_174 = arith.constant dense<0.000000e+00> : vector<2x32xf32>
    %352 = tpu.matmul %350, %351, %cst_174 {dimension_numbers = #tpu.dot_dimension_numbers<[1], [0], [0], [1], [0, 0, 1, 1], [], []>} : vector<2x32xbf16>, vector<32x32xbf16>, vector<2x32xf32> -> vector<2x32xf32>
    %c0_175 = arith.constant 0 : index
    %c0_176 = arith.constant 0 : index
    %353 = vector.load %arg20[%c0_175, %c0_176] : memref<1x32xf32, #tpu.memory_space<vmem>>, vector<1x32xf32>
    %354 = vector.broadcast %353 : vector<1x32xf32> to vector<2x32xf32>
    %355 = arith.addf %352, %354 : vector<2x32xf32>
    %356 = math.tanh %355 : vector<2x32xf32>
    %357 = arith.truncf %356 : vector<2x32xf32> to vector<2x32xbf16>
    %c0_177 = arith.constant 0 : index
    %c0_178 = arith.constant 0 : index
    %358 = vector.load %arg21[%c0_177, %c0_178] : memref<32x32xbf16, #tpu.memory_space<vmem>>, vector<32x32xbf16>
    %cst_179 = arith.constant dense<0.000000e+00> : vector<2x32xf32>
    %359 = tpu.matmul %357, %358, %cst_179 {dimension_numbers = #tpu.dot_dimension_numbers<[1], [0], [0], [1], [0, 0, 1, 1], [], []>} : vector<2x32xbf16>, vector<32x32xbf16>, vector<2x32xf32> -> vector<2x32xf32>
    %c0_180 = arith.constant 0 : index
    %c0_181 = arith.constant 0 : index
    %360 = vector.load %arg22[%c0_180, %c0_181] : memref<1x32xf32, #tpu.memory_space<vmem>>, vector<1x32xf32>
    %361 = vector.broadcast %360 : vector<1x32xf32> to vector<2x32xf32>
    %362 = arith.addf %359, %361 : vector<2x32xf32>
    %363 = arith.truncf %362 : vector<2x32xf32> to vector<2x32xbf16>
    %c0_182 = arith.constant 0 : index
    %c0_183 = arith.constant 0 : index
    %364 = vector.load %arg23[%c0_182, %c0_183] : memref<32x3xbf16, #tpu.memory_space<vmem>>, vector<32x3xbf16>
    %cst_184 = arith.constant dense<0.000000e+00> : vector<2x3xf32>
    %365 = tpu.matmul %363, %364, %cst_184 {dimension_numbers = #tpu.dot_dimension_numbers<[1], [0], [0], [1], [0, 0, 1, 1], [], []>} : vector<2x32xbf16>, vector<32x3xbf16>, vector<2x3xf32> -> vector<2x3xf32>
    %c0_185 = arith.constant 0 : index
    %c0_186 = arith.constant 0 : index
    %366 = vector.load %arg24[%c0_185, %c0_186] : memref<1x3xf32, #tpu.memory_space<vmem>>, vector<1x3xf32>
    %367 = vector.broadcast %366 : vector<1x3xf32> to vector<2x3xf32>
    %368 = arith.addf %365, %367 : vector<2x3xf32>
    %c0_187 = arith.constant 0 : index
    %c0_188 = arith.constant 0 : index
    %369 = vector.load %arg25[%c0_187, %c0_188] : memref<2x3xf32, #tpu.memory_space<vmem>>, vector<2x3xf32>
    tpu.vector_store %arg25[%c0_187, %c0_188], %368 {strides = array<i32>} : memref<2x3xf32, #tpu.memory_space<vmem>>, vector<2x3xf32>,
    return
  }
}

</mosaic_0001>

<llo_original>
// kernel: forward.1
$region0: #{forward.1}
  #allocation0 [shape = 'u32[]', space=smem, size = 0x4, offset = 0x4, fixed_abs, tag = 'smem constant byte address 0x4 - core index']
  #allocation1 [shape = 'u32[72,128]{1,0:T(1,128)}', space=vmem, size = 0x9000, scoped, tag = 'internal scratch']
  %s0 = inlined_call_operand.vmem [shape: s32[2,8], index: 0, kind: input, shape index: {}]
  %s1 = inlined_call_operand.vmem [shape: s32[2,8], index: 1, kind: input, shape index: {}]
  %s2 = inlined_call_operand.vmem [shape: f32[128,32], index: 2, kind: input, shape index: {}]
  %s3 = inlined_call_operand.vmem [shape: f32[8,32], index: 3, kind: input, shape index: {}]
  %s4 = inlined_call_operand.vmem [shape: f32[1,32], index: 4, kind: input, shape index: {}]
  %s5 = inlined_call_operand.vmem [shape: f32[1,32], index: 5, kind: input, shape index: {}]
  %s6 = inlined_call_operand.vmem [shape: f32[1,32], index: 6, kind: input, shape index: {}]
  %s7 = inlined_call_operand.vmem [shape: bf16[2,32,96], index: 7, kind: input, shape index: {}]
  %s8 = inlined_call_operand.vmem [shape: f32[2,1,96], index: 8, kind: input, shape index: {}]
  %s9 = inlined_call_operand.vmem [shape: bf16[2,32,32], index: 9, kind: input, shape index: {}]
  %s10 = inlined_call_operand.vmem [shape: f32[2,1,32], index: 10, kind: input, shape index: {}]
  %s11 = inlined_call_operand.vmem [shape: f32[2,1,32], index: 11, kind: input, shape index: {}]
  %s12 = inlined_call_operand.vmem [shape: f32[2,1,32], index: 12, kind: input, shape index: {}]
  %s13 = inlined_call_operand.vmem [shape: bf16[2,32,64], index: 13, kind: input, shape index: {}]
  %s14 = inlined_call_operand.vmem [shape: f32[2,1,64], index: 14, kind: input, shape index: {}]
  %s15 = inlined_call_operand.vmem [shape: bf16[2,64,32], index: 15, kind: input, shape index: {}]
  %s16 = inlined_call_operand.vmem [shape: f32[2,1,32], index: 16, kind: input, shape index: {}]
  %s17 = inlined_call_operand.vmem [shape: f32[2,1,32], index: 17, kind: input, shape index: {}]
  %s18 = inlined_call_operand.vmem [shape: f32[2,1,32], index: 18, kind: input, shape index: {}]
  %s19 = inlined_call_operand.vmem [shape: bf16[32,32], index: 19, kind: input, shape index: {}]
  %s20 = inlined_call_operand.vmem [shape: f32[1,32], index: 20, kind: input, shape index: {}]
  %s21 = inlined_call_operand.vmem [shape: bf16[32,32], index: 21, kind: input, shape index: {}]
  %s22 = inlined_call_operand.vmem [shape: f32[1,32], index: 22, kind: input, shape index: {}]
  %s23 = inlined_call_operand.vmem [shape: bf16[32,3], index: 23, kind: input, shape index: {}]
  %s24 = inlined_call_operand.vmem [shape: f32[1,3], index: 24, kind: input, shape index: {}]
  %s25 = inlined_call_operand.hbm [shape: f32[2,3], index: 25, kind: output, shape index: {}]
  %s26 = sld [smem:[#allocation0]]
  $region114: #{forward.1} parent=0
    _
  %s28 = ssub.s32 1, %s26
  %s29 = scalar_select 0, %s28, %s26
  $region1: #{forward.1} parent=0
    #allocation2 [shape = 'u8[1024]{0}', space=smem, size = 0x400, scoped, tag = 'input window, operand 0, single buffered']
    #allocation3 [shape = 's32[1]{0}', space=sflag, size = 0x4, scoped, tag = 'scoped memory for forward.1']
    #allocation4 [shape = 's32[1]{0}', space=sflag, size = 0x4, scoped, tag = 'scoped memory for forward.1']
    #allocation5 [shape = 'u8[1024]{0}', space=vmem, size = 0x400, scoped, tag = 'output window, operand 0, single buffered']
    %30 = vsyncpa [#allocation4], 0
    %31 = vsyncpa [#allocation3], 0
    // Predicated region
    $region2: #{forward.1} parent=1 // pred_check
      _
    $region3: #{forward.1} parent=1 // pred_check_branch
      %33 = sbr.rel (0) target = $region5
    $region4: #{forward.1} parent=1 // pred_region
      %35 = vsyncadd [#allocation4], 0
      %s37 = sshll.u32 %s0, 4
      %s38 = int_to_ptr.vmem [resolvable:$true] %s37
      %40 = dma.vmem_to_smem %s38, 32, [#allocation2], [#allocation4]
    $region5: #{forward.1} parent=1 // pred_fallthru
      _
    // Predicated region
    $region6: #{forward.1} parent=1 // pred_check
      _
    $region7: #{forward.1} parent=1 // pred_check_branch
      %42 = sbr.rel (0) target = $region9
    $region8: #{forward.1} parent=1 // pred_region
      _
    $region9: #{forward.1} parent=1 // pred_fallthru
      _
    // Predicated region
    $region10: #{forward.1} parent=1 // pred_check
      _
    $region11: #{forward.1} parent=1 // pred_check_branch
      %44 = sbr.rel (0) target = $region13
    $region12: #{forward.1} parent=1 // pred_region
      _
    $region13: #{forward.1} parent=1 // pred_fallthru
      _
    // Predicated region
    $region14: #{forward.1} parent=1 // pred_check
      _
    $region15: #{forward.1} parent=1 // pred_check_branch
      %46 = sbr.rel (0) target = $region17
    $region16: #{forward.1} parent=1 // pred_region
      _
    $region17: #{forward.1} parent=1 // pred_fallthru
      _
    // Predicated region
    $region18: #{forward.1} parent=1 // pred_check
      _
    $region19: #{forward.1} parent=1 // pred_check_branch
      %48 = sbr.rel (0) target = $region21
    $region20: #{forward.1} parent=1 // pred_region
      _
    $region21: #{forward.1} parent=1 // pred_fallthru
      _
    // Predicated region
    $region22: #{forward.1} parent=1 // pred_check
      _
    $region23: #{forward.1} parent=1 // pred_check_branch
      %50 = sbr.rel (0) target = $region25
    $region24: #{forward.1} parent=1 // pred_region
      _
    $region25: #{forward.1} parent=1 // pred_fallthru
      _
    // Predicated region
    $region26: #{forward.1} parent=1 // pred_check
      _
    $region27: #{forward.1} parent=1 // pred_check_branch
      %52 = sbr.rel (0) target = $region29
    $region28: #{forward.1} parent=1 // pred_region
      _
    $region29: #{forward.1} parent=1 // pred_fallthru
      _
    // Predicated region
    $region30: #{forward.1} parent=1 // pred_check
      _
    $region31: #{forward.1} parent=1 // pred_check_branch
      %54 = sbr.rel (0) target = $region33
    $region32: #{forward.1} parent=1 // pred_region
      _
    $region33: #{forward.1} parent=1 // pred_fallthru
      _
    // Predicated region
    $region34: #{forward.1} parent=1 // pred_check
      _
    $region35: #{forward.1} parent=1 // pred_check_branch
      %56 = sbr.rel (0) target = $region37
    $region36: #{forward.1} parent=1 // pred_region
      _
    $region37: #{forward.1} parent=1 // pred_fallthru
      _
    // Predicated region
    $region38: #{forward.1} parent=1 // pred_check
      _
    $region39: #{forward.1} parent=1 // pred_check_branch
      %58 = sbr.rel (0) target = $region41
    $region40: #{forward.1} parent=1 // pred_region
      _
    $region41: #{forward.1} parent=1 // pred_fallthru
      _
    // Predicated region
    $region42: #{forward.1} parent=1 // pred_check
      _
    $region43: #{forward.1} parent=1 // pred_check_branch
      %60 = sbr.rel (0) target = $region45
    $region44: #{forward.1} parent=1 // pred_region
      _
    $region45: #{forward.1} parent=1 // pred_fallthru
      _
    // Predicated region
    $region46: #{forward.1} parent=1 // pred_check
      _
    $region47: #{forward.1} parent=1 // pred_check_branch
      %62 = sbr.rel (0) target = $region49
    $region48: #{forward.1} parent=1 // pred_region
      _
    $region49: #{forward.1} parent=1 // pred_fallthru
      _
    // Predicated region
    $region50: #{forward.1} parent=1 // pred_check
      _
    $region51: #{forward.1} parent=1 // pred_check_branch
      %64 = sbr.rel (0) target = $region53
    $region52: #{forward.1} parent=1 // pred_region
      _
    $region53: #{forward.1} parent=1 // pred_fallthru
      _
    // Predicated region
    $region54: #{forward.1} parent=1 // pred_check
      _
    $region55: #{forward.1} parent=1 // pred_check_branch
      %66 = sbr.rel (0) target = $region57
    $region56: #{forward.1} parent=1 // pred_region
      _
    $region57: #{forward.1} parent=1 // pred_fallthru
      _
    // Predicated region
    $region58: #{forward.1} parent=1 // pred_check
      _
    $region59: #{forward.1} parent=1 // pred_check_branch
      %68 = sbr.rel (0) target = $region61
    $region60: #{forward.1} parent=1 // pred_region
      _
    $region61: #{forward.1} parent=1 // pred_fallthru
      _
    // Predicated region
    $region62: #{forward.1} parent=1 // pred_check
      _
    $region63: #{forward.1} parent=1 // pred_check_branch
      %70 = sbr.rel (0) target = $region65
    $region64: #{forward.1} parent=1 // pred_region
      _
    $region65: #{forward.1} parent=1 // pred_fallthru
      _
    // Predicated region
    $region66: #{forward.1} parent=1 // pred_check
      _
    $region67: #{forward.1} parent=1 // pred_check_branch
      %72 = sbr.rel (0) target = $region69
    $region68: #{forward.1} parent=1 // pred_region
      _
    $region69: #{forward.1} parent=1 // pred_fallthru
      _
    // Predicated region
    $region70: #{forward.1} parent=1 // pred_check
      _
    $region71: #{forward.1} parent=1 // pred_check_branch
      %74 = sbr.rel (0) target = $region73
    $region72: #{forward.1} parent=1 // pred_region
      _
    $region73: #{forward.1} parent=1 // pred_fallthru
      _
    // Predicated region
    $region74: #{forward.1} parent=1 // pred_check
      _
    $region75: #{forward.1} parent=1 // pred_check_branch
      %76 = sbr.rel (0) target = $region77
    $region76: #{forward.1} parent=1 // pred_region
      _
    $region77: #{forward.1} parent=1 // pred_fallthru
      _
    // Predicated region
    $region78: #{forward.1} parent=1 // pred_check
      _
    $region79: #{forward.1} parent=1 // pred_check_branch
      %78 = sbr.rel (0) target = $region81
    $region80: #{forward.1} parent=1 // pred_region
      _
    $region81: #{forward.1} parent=1 // pred_fallthru
      _
    // Predicated region
    $region82: #{forward.1} parent=1 // pred_check
      _
    $region83: #{forward.1} parent=1 // pred_check_branch
      %80 = sbr.rel (0) target = $region85
    $region84: #{forward.1} parent=1 // pred_region
      _
    $region85: #{forward.1} parent=1 // pred_fallthru
      _
    // Predicated region
    $region86: #{forward.1} parent=1 // pred_check
      _
    $region87: #{forward.1} parent=1 // pred_check_branch
      %82 = sbr.rel (0) target = $region89
    $region88: #{forward.1} parent=1 // pred_region
      _
    $region89: #{forward.1} parent=1 // pred_fallthru
      _
    // Predicated region
    $region90: #{forward.1} parent=1 // pred_check
      _
    $region91: #{forward.1} parent=1 // pred_check_branch
      %84 = sbr.rel (0) target = $region93
    $region92: #{forward.1} parent=1 // pred_region
      _
    $region93: #{forward.1} parent=1 // pred_fallthru
      _
    // Predicated region
    $region94: #{forward.1} parent=1 // pred_check
      _
    $region95: #{forward.1} parent=1 // pred_check_branch
      %86 = sbr.rel (0) target = $region97
    $region96: #{forward.1} parent=1 // pred_region
      _
    $region97: #{forward.1} parent=1 // pred_fallthru
      _
    // Predicated region
    $region98: #{forward.1} parent=1 // pred_check
      _
    $region99: #{forward.1} parent=1 // pred_check_branch
      %88 = sbr.rel (0) target = $region101
    $region100: #{forward.1} parent=1 // pred_region
      _
    $region101: #{forward.1} parent=1 // pred_fallthru
      _
    // Predicated region
    $region102: #{forward.1} parent=1 // pred_check
      _
    $region103: #{forward.1} parent=1 // pred_check_branch
      %90 = sbr.rel (0) target = $region105
    $region104: #{forward.1} parent=1 // pred_region
      %92 = dma.done [#allocation4], 32
    $region105: #{forward.1} parent=1 // pred_fallthru
      _
    %93 = sfence
    %s95 = sld [smem:[#allocation2]]
    %s96 = scalar_lea.vmem %s2, %s95
    %v97 = vld [vmem:[%s96] sm:$0x1]
    %s98 = sld [smem:[#allocation2 + $0x1]]
    %s99 = scalar_lea.vmem %s2, %s98
    %v100 = vld [vmem:[%s99] sm:$0x1]
    %s101 = sld [smem:[#allocation2 + $0x2]]
    %s102 = scalar_lea.vmem %s2, %s101
    %v103 = vld [vmem:[%s102] sm:$0x1]
    %s104 = sld [smem:[#allocation2 + $0x3]]
    %s105 = scalar_lea.vmem %s2, %s104
    %v106 = vld [vmem:[%s105] sm:$0x1]
    %s107 = sld [smem:[#allocation2 + $0x4]]
    %s108 = scalar_lea.vmem %s2, %s107
    %v109 = vld [vmem:[%s108] sm:$0x1]
    %s110 = sld [smem:[#allocation2 + $0x5]]
    %s111 = scalar_lea.vmem %s2, %s110
    %v112 = vld [vmem:[%s111] sm:$0x1]
    %s113 = sld [smem:[#allocation2 + $0x6]]
    %s114 = scalar_lea.vmem %s2, %s113
    %v115 = vld [vmem:[%s114] sm:$0x1]
    %s116 = sld [smem:[#allocation2 + $0x7]]
    %s117 = scalar_lea.vmem %s2, %s116
    %v118 = vld [vmem:[%s117] sm:$0x1]
    %s119 = sld [smem:[#allocation2 + $0x80]]
    %s120 = scalar_lea.vmem %s2, %s119
    %v121 = vld [vmem:[%s120] sm:$0x1]
    %s122 = sld [smem:[#allocation2 + $0x81]]
    %s123 = scalar_lea.vmem %s2, %s122
    %v124 = vld [vmem:[%s123] sm:$0x1]
    %s125 = sld [smem:[#allocation2 + $0x82]]
    %s126 = scalar_lea.vmem %s2, %s125
    %v127 = vld [vmem:[%s126] sm:$0x1]
    %s128 = sld [smem:[#allocation2 + $0x83]]
    %s129 = scalar_lea.vmem %s2, %s128
    %v130 = vld [vmem:[%s129] sm:$0x1]
    %s131 = sld [smem:[#allocation2 + $0x84]]
    %s132 = scalar_lea.vmem %s2, %s131
    %v133 = vld [vmem:[%s132] sm:$0x1]
    %s134 = sld [smem:[#allocation2 + $0x85]]
    %s135 = scalar_lea.vmem %s2, %s134
    %v136 = vld [vmem:[%s135] sm:$0x1]
    %s137 = sld [smem:[#allocation2 + $0x86]]
    %s138 = scalar_lea.vmem %s2, %s137
    %v139 = vld [vmem:[%s138] sm:$0x1]
    %s140 = sld [smem:[#allocation2 + $0x87]]
    %s141 = scalar_lea.vmem %s2, %s140
    %v142 = vld [vmem:[%s141] sm:$0x1]
    %v144 = vrot.slane %v100, 7
    %v147 = vrot.slane %v103, 6
    %v150 = vrot.slane %v106, 5
    %v153 = vrot.slane %v109, 4
    %v156 = vrot.slane %v112, 3
    %v159 = vrot.slane %v115, 2
    %v162 = vrot.slane %v118, 1
    %v165 = vrot.slane %v124, 7
    %v168 = vrot.slane %v127, 6
    %v171 = vrot.slane %v130, 5
    %v174 = vrot.slane %v133, 4
    %v177 = vrot.slane %v136, 3
    %v180 = vrot.slane %v139, 2
    %v183 = vrot.slane %v142, 1
    %vm185 = vcmask 1040384
    %v186 = vsel %vm185, %v97, %v144
    %vm187 = vcmask 1041408
    %v188 = vsel %vm187, %v186, %v147
    %vm189 = vcmask 1042432
    %v190 = vsel %vm189, %v188, %v150
    %vm191 = vcmask 1043456
    %v192 = vsel %vm191, %v190, %v153
    %vm193 = vcmask 1044480
    %v194 = vsel %vm193, %v192, %v156
    %vm195 = vcmask 1045504
    %v196 = vsel %vm195, %v194, %v159
    %vm197 = vcmask 1046528
    %v198 = vsel %vm197, %v196, %v162
    %v199 = vsel %vm185, %v121, %v165
    %v200 = vsel %vm187, %v199, %v168
    %v201 = vsel %vm189, %v200, %v171
    %v202 = vsel %vm191, %v201, %v174
    %v203 = vsel %vm193, %v202, %v177
    %v204 = vsel %vm195, %v203, %v180
    %v205 = vsel %vm197, %v204, %v183
    %v206 = vld [vmem:[%s3] sm:$0xff]
    %v207 = vadd.f32 %v198, %v206
    %v208 = vadd.f32 %v205, %v206
    %v209 = vld [vmem:[%s4] sm:$0x1]
    %v211 = vperm.slane %v209, 0
    %v213 = vadd.f32 %v207, %v211
    %v214 = vadd.f32 %v208, %v211
    %v215 = vld [vmem:[%s5] sm:$0x1]
    %v216 = vld [vmem:[%s6] sm:$0x1]
    %vm217 = vcmask 261120
    %v218 = vsel %vm217, %v213, 0.0
    %219 = vadd.xlane.f32.xlu0 %v218
    %v220 = vpop.xlane.xlu0 %219
    %v221 = vsel %vm217, %v214, 0.0
    %222 = vadd.xlane.f32.xlu0 %v221
    %v223 = vpop.xlane.xlu0 %222
    %v224 = vrcp.pop 32.0
    %v225 = vmul.f32 32.0, %v224
    %v226 = vsub.f32 1.0, %v225
    %v227 = vmul.f32 %v224, %v226
    %v228 = vadd.f32 %v224, %v227
    %vm229 = vweird.f32 %v224
    %v230 = vsel %vm229, %v224, %v228
    %v231 = vmul.f32 %v220, %v230
    %v232 = vmul.f32 %v223, %v230
    %v233 = vsub.f32 %v213, %v231
    %v234 = vsub.f32 %v214, %v232
    %v235 = vmul.f32 %v233, %v233
    %v236 = vmul.f32 %v234, %v234
    %v237 = vsel %vm217, %v235, 0.0
    %238 = vadd.xlane.f32.xlu0 %v237
    %v239 = vpop.xlane.xlu0 %238
    %v240 = vsel %vm217, %v236, 0.0
    %241 = vadd.xlane.f32.xlu0 %v240
    %v242 = vpop.xlane.xlu0 %241
    %v243 = vmul.f32 %v239, %v230
    %v244 = vmul.f32 %v242, %v230
    %v245 = vadd.f32 %v243, 1e-12
    %v246 = vadd.f32 %v244, 1e-12
    %v247 = vrsqrt.pop %v245
    %v248 = vmul.f32 %v247, %v245
    %v249 = vmul.f32 %v248, %v247
    %v250 = vmul.f32 0.5, %v249
    %v251 = vsub.f32 1.5, %v250
    %v252 = vmul.f32 %v247, %v251
    %vm253 = vweird.f32 %v245
    %vm254 = vweird.f32 %v247
    %vm255 = vmor %vm253, %vm254
    %v256 = vsel %vm255, %v247, %v252
    %v257 = vrsqrt.pop %v246
    %v258 = vmul.f32 %v257, %v246
    %v259 = vmul.f32 %v258, %v257
    %v260 = vmul.f32 0.5, %v259
    %v261 = vsub.f32 1.5, %v260
    %v262 = vmul.f32 %v257, %v261
    %vm263 = vweird.f32 %v246
    %vm264 = vweird.f32 %v257
    %vm265 = vmor %vm263, %vm264
    %v266 = vsel %vm265, %v257, %v262
    %v267 = vmul.f32 %v233, %v256
    %v268 = vmul.f32 %v234, %v266
    %v270 = vperm.slane %v215, 0
    %v272 = vmul.f32 %v267, %v270
    %v273 = vmul.f32 %v268, %v270
    %v275 = vperm.slane %v216, 0
    %v277 = vadd.f32 %v272, %v275
    %v278 = vadd.f32 %v273, %v275
    %v279 = vld [vmem:[%s1] sm:$0x3]
    %v280 = vcvt.s32.f32 %v279
    %v281 = vsub.f32 1.0, %v280
    %v282 = vmul.f32 %v281, -1e+09
    %v284 = vrot.slane %v282, 1
    %v285 = vpack.c.bf16 %v278, %v277
    %v286 = vld [vmem:[%s7] sm:$0xf]
    %v287 = vld [vmem:[%s7 + $0x4] sm:$0xf]
    %v288 = vld [vmem:[%s7 + $0x8] sm:$0xf]
    %v289 = vld [vmem:[%s7 + $0xc] sm:$0xf]
    %v290 = vld [vmem:[%s8] sm:$0x1]
    %v292 = vperm.slane %v290, 0
    %v298 = vunpack.c.l.b16 %v286
    %v299 = vunpack.c.l.b16 %v287
    %v300 = vunpack.c.l.b16 %v288
    %v301 = vunpack.c.l.b16 %v289
    %v302 = vpack.c.b16 %v299, %v298
    %v303 = vpack.c.b16 %v301, %v300
    %v307 = vsel %vm217, %v285, 0
    %309 = vmatpush.bf16.msra.mxu0 0
    %310 = vmatpush.bf16.msra.mxu0 0
    %311 = vmatpush.bf16.msra.mxu0 0
    %312 = vmatpush.bf16.msra.mxu0 0
    %313 = vmatpush.bf16.msra.mxu0 0
    %314 = vmatpush.bf16.msra.mxu0 0
    %315 = vmatpush.bf16.msra.mxu0 %v303
    %316 = vmatpush.bf16.msra.mxu0 %v302
    %317 = vmatmul.bf16.gmra.mxu0 %v307
    %v318 = vpop.f32.mrf.mxu0
    %v319 = vadd.f32 %v292, %v318
    %v320 = vpop.f32.mrf.mxu0
    %v321 = vadd.f32 %v292, %v320
    %322 = vdwg.mxu0
    %v323 = vpack.c.bf16 %v319, %v319
    %v324 = vpack.c.bf16 %v321, %v321
    %327 = vrot.lane.b32.xlu0 %v323, 112
    %v328 = vpop.permute.xlu0 %327
    %329 = vrot.lane.b32.xlu0 %v324, 112
    %v330 = vpop.permute.xlu0 %329
    %v331 = vperm.slane %v282, 0
    %v332 = vperm.slane %v284, 0
    %v335 = vunpack.c.l.b16 %v323
    %v336 = vpack.c.b16 %v335, %v335
    %337 = vrot.lane.b32.xlu0 %v336, 96
    %v338 = vpop.permute.xlu0 %337
    %vm339 = vcmask 130048
    %v341 = vsel %vm339, %v323, 0
    %v344 = vsel %vm339, %v338, 0
    %346 = vmatpush.bf16.xpose.msra.mxu0 0
    %347 = vmatpush.bf16.xpose.msra.mxu0 0
    %348 = vmatpush.bf16.xpose.msra.mxu0 0
    %349 = vmatpush.bf16.xpose.msra.mxu0 0
    %350 = vmatpush.bf16.xpose.msra.mxu0 0
    %351 = vmatpush.bf16.xpose.msra.mxu0 0
    %352 = vmatpush.bf16.xpose.msra.mxu0 0
    %353 = vmatpush.bf16.xpose.msra.mxu0 %v344
    %354 = vmatmul.bf16.gmra.mxu0 %v341
    %v355 = vpop.f32.mrf.mxu0
    %v356 = vadd.f32 %v331, %v355
    %v357 = vpop.f32.mrf.mxu0
    %358 = vdwg.mxu0
    %v359 = vunpack.c.l.b16 %v324
    %v360 = vpack.c.b16 %v359, %v359
    %361 = vrot.lane.b32.xlu0 %v360, 96
    %v362 = vpop.permute.xlu0 %361
    %v364 = vsel %vm339, %v324, 0
    %v367 = vsel %vm339, %v362, 0
    %369 = vmatpush.bf16.xpose.msra.mxu0 0
    %370 = vmatpush.bf16.xpose.msra.mxu0 0
    %371 = vmatpush.bf16.xpose.msra.mxu0 0
    %372 = vmatpush.bf16.xpose.msra.mxu0 0
    %373 = vmatpush.bf16.xpose.msra.mxu0 0
    %374 = vmatpush.bf16.xpose.msra.mxu0 0
    %375 = vmatpush.bf16.xpose.msra.mxu0 0
    %376 = vmatpush.bf16.xpose.msra.mxu0 %v367
    %377 = vmatmul.bf16.gmra.mxu0 %v364
    %v378 = vpop.f32.mrf.mxu0
    %v379 = vadd.f32 %v332, %v378
    %v380 = vpop.f32.mrf.mxu0
    %381 = vdwg.mxu0
    %v382 = vunpack.c.l.b16 %v328
    %v383 = vpack.c.b16 %v382, %v382
    %384 = vrot.lane.b32.xlu0 %v383, 96
    %v385 = vpop.permute.xlu0 %384
    %v387 = vsel %vm339, %v328, 0
    %v390 = vsel %vm339, %v385, 0
    %392 = vmatpush.bf16.xpose.msra.mxu0 0
    %393 = vmatpush.bf16.xpose.msra.mxu0 0
    %394 = vmatpush.bf16.xpose.msra.mxu0 0
    %395 = vmatpush.bf16.xpose.msra.mxu0 0
    %396 = vmatpush.bf16.xpose.msra.mxu0 0
    %397 = vmatpush.bf16.xpose.msra.mxu0 0
    %398 = vmatpush.bf16.xpose.msra.mxu0 0
    %399 = vmatpush.bf16.xpose.msra.mxu0 %v390
    %400 = vmatmul.bf16.gmra.mxu0 %v387
    %v401 = vpop.f32.mrf.mxu0
    %v402 = vadd.f32 %v331, %v401
    %v403 = vpop.f32.mrf.mxu0
    %404 = vdwg.mxu0
    %v405 = vunpack.c.l.b16 %v330
    %v406 = vpack.c.b16 %v405, %v405
    %407 = vrot.lane.b32.xlu0 %v406, 96
    %v408 = vpop.permute.xlu0 %407
    %v410 = vsel %vm339, %v330, 0
    %v413 = vsel %vm339, %v408, 0
    %415 = vmatpush.bf16.xpose.msra.mxu0 0
    %416 = vmatpush.bf16.xpose.msra.mxu0 0
    %417 = vmatpush.bf16.xpose.msra.mxu0 0
    %418 = vmatpush.bf16.xpose.msra.mxu0 0
    %419 = vmatpush.bf16.xpose.msra.mxu0 0
    %420 = vmatpush.bf16.xpose.msra.mxu0 0
    %421 = vmatpush.bf16.xpose.msra.mxu0 0
    %422 = vmatpush.bf16.xpose.msra.mxu0 %v413
    %423 = vmatmul.bf16.gmra.mxu0 %v410
    %v424 = vpop.f32.mrf.mxu0
    %v425 = vadd.f32 %v332, %v424
    %v426 = vpop.f32.mrf.mxu0
    %427 = vdwg.mxu0
    %vm428 = vcmask 64512
    %v429 = vsel %vm428, %v356, -inf
    %430 = vmax.xlane.f32.xlu0 %v429
    %v431 = vpop.xlane.xlu0 %430
    %v432 = vsel %vm428, %v379, -inf
    %433 = vmax.xlane.f32.xlu0 %v432
    %v434 = vpop.xlane.xlu0 %433
    %v435 = vsel %vm428, %v402, -inf
    %436 = vmax.xlane.f32.xlu0 %v435
    %v437 = vpop.xlane.xlu0 %436
    %v438 = vsel %vm428, %v425, -inf
    %439 = vmax.xlane.f32.xlu0 %v438
    %v440 = vpop.xlane.xlu0 %439
    %v441 = vsub.f32 %v356, %v431
    %v442 = vsub.f32 %v379, %v434
    %v443 = vsub.f32 %v402, %v437
    %v444 = vsub.f32 %v425, %v440
    %v445 = vmul.f32 %v441, 1.442695
    %v446 = vpow.pop %v445
    %v447 = vmul.f32 %v442, 1.442695
    %v448 = vpow.pop %v447
    %v449 = vmul.f32 %v443, 1.442695
    %v450 = vpow.pop %v449
    %v451 = vmul.f32 %v444, 1.442695
    %v452 = vpow.pop %v451
    %v453 = vsel %vm428, %v446, 0.0
    %454 = vadd.xlane.f32.xlu0 %v453
    %v455 = vpop.xlane.xlu0 %454
    %v456 = vsel %vm428, %v448, 0.0
    %457 = vadd.xlane.f32.xlu0 %v456
    %v458 = vpop.xlane.xlu0 %457
    %v459 = vsel %vm428, %v450, 0.0
    %460 = vadd.xlane.f32.xlu0 %v459
    %v461 = vpop.xlane.xlu0 %460
    %v462 = vsel %vm428, %v452, 0.0
    %463 = vadd.xlane.f32.xlu0 %v462
    %v464 = vpop.xlane.xlu0 %463
    %v465 = vrcp.pop %v455
    %v466 = vrcp.pop %v458
    %v467 = vrcp.pop %v461
    %v468 = vrcp.pop %v464
    %v469 = vmul.f32 %v446, %v465
    %v470 = vmul.f32 %v448, %v466
    %v471 = vmul.f32 %v450, %v467
    %v472 = vmul.f32 %v452, %v468
    %v473 = vpack.c.bf16 %v469, %v469
    %v474 = vpack.c.bf16 %v470, %v470
    %v475 = vpack.c.bf16 %v471, %v471
    %v476 = vpack.c.bf16 %v472, %v472
    %477 = vrot.lane.b32.xlu0 %v336, 64
    %v478 = vpop.permute.xlu0 %477
    %v480 = vsel %vm428, %v473, 0
    %v483 = vsel %vm191, %v478, 0
    %485 = vmatpush.bf16.msra.mxu0 0
    %486 = vmatpush.bf16.msra.mxu0 0
    %487 = vmatpush.bf16.msra.mxu0 0
    %488 = vmatpush.bf16.msra.mxu0 0
    %489 = vmatpush.bf16.msra.mxu0 0
    %490 = vmatpush.bf16.msra.mxu0 0
    %491 = vmatpush.bf16.msra.mxu0 0
    %492 = vmatpush.bf16.msra.mxu0 %v483
    %493 = vmatmul.bf16.gmra.mxu0 %v480
    %v494 = vpop.f32.mrf.mxu0
    %v495 = vadd.f32 0.0, %v494
    %v496 = vpop.f32.mrf.mxu0
    %497 = vdwg.mxu0
    %498 = vrot.lane.b32.xlu0 %v360, 64
    %v499 = vpop.permute.xlu0 %498
    %v501 = vsel %vm428, %v474, 0
    %v504 = vsel %vm191, %v499, 0
    %506 = vmatpush.bf16.msra.mxu0 0
    %507 = vmatpush.bf16.msra.mxu0 0
    %508 = vmatpush.bf16.msra.mxu0 0
    %509 = vmatpush.bf16.msra.mxu0 0
    %510 = vmatpush.bf16.msra.mxu0 0
    %511 = vmatpush.bf16.msra.mxu0 0
    %512 = vmatpush.bf16.msra.mxu0 0
    %513 = vmatpush.bf16.msra.mxu0 %v504
    %514 = vmatmul.bf16.gmra.mxu0 %v501
    %v515 = vpop.f32.mrf.mxu0
    %v516 = vadd.f32 0.0, %v515
    %v517 = vpop.f32.mrf.mxu0
    %518 = vdwg.mxu0
    %519 = vrot.lane.b32.xlu0 %v383, 64
    %v520 = vpop.permute.xlu0 %519
    %v522 = vsel %vm428, %v475, 0
    %v525 = vsel %vm191, %v520, 0
    %527 = vmatpush.bf16.msra.mxu0 0
    %528 = vmatpush.bf16.msra.mxu0 0
    %529 = vmatpush.bf16.msra.mxu0 0
    %530 = vmatpush.bf16.msra.mxu0 0
    %531 = vmatpush.bf16.msra.mxu0 0
    %532 = vmatpush.bf16.msra.mxu0 0
    %533 = vmatpush.bf16.msra.mxu0 0
    %534 = vmatpush.bf16.msra.mxu0 %v525
    %535 = vmatmul.bf16.gmra.mxu0 %v522
    %v536 = vpop.f32.mrf.mxu0
    %v537 = vadd.f32 0.0, %v536
    %v538 = vpop.f32.mrf.mxu0
    %539 = vdwg.mxu0
    %540 = vrot.lane.b32.xlu0 %v406, 64
    %v541 = vpop.permute.xlu0 %540
    %v543 = vsel %vm428, %v476, 0
    %v546 = vsel %vm191, %v541, 0
    %548 = vmatpush.bf16.msra.mxu0 0
    %549 = vmatpush.bf16.msra.mxu0 0
    %550 = vmatpush.bf16.msra.mxu0 0
    %551 = vmatpush.bf16.msra.mxu0 0
    %552 = vmatpush.bf16.msra.mxu0 0
    %553 = vmatpush.bf16.msra.mxu0 0
    %554 = vmatpush.bf16.msra.mxu0 0
    %555 = vmatpush.bf16.msra.mxu0 %v546
    %556 = vmatmul.bf16.gmra.mxu0 %v543
    %v557 = vpop.f32.mrf.mxu0
    %v558 = vadd.f32 0.0, %v557
    %v559 = vpop.f32.mrf.mxu0
    %560 = vdwg.mxu0
    %563 = vrot.lane.b32.xlu0 %v537, 16
    %v564 = vpop.permute.xlu0 %563
    %565 = vrot.lane.b32.xlu0 %v558, 16
    %v566 = vpop.permute.xlu0 %565
    %v569 = vsel %vm339, %v495, %v564
    %v570 = vsel %vm339, %v516, %v566
    %v571 = vpack.c.bf16 %v570, %v569
    %v572 = vld [vmem:[%s9] sm:$0xf]
    %v573 = vld [vmem:[%s9 + $0x4] sm:$0xf]
    %v574 = vld [vmem:[%s9 + $0x8] sm:$0xf]
    %v575 = vld [vmem:[%s9 + $0xc] sm:$0xf]
    %v576 = vld [vmem:[%s10] sm:$0x1]
    %v578 = vperm.slane %v576, 0
    %v584 = vunpack.c.l.b16 %v572
    %v585 = vunpack.c.l.b16 %v573
    %v586 = vunpack.c.l.b16 %v574
    %v587 = vunpack.c.l.b16 %v575
    %v588 = vpack.c.b16 %v585, %v584
    %v589 = vpack.c.b16 %v587, %v586
    %v593 = vsel %vm217, %v571, 0
    %595 = vmatpush.bf16.msra.mxu0 0
    %596 = vmatpush.bf16.msra.mxu0 0
    %597 = vmatpush.bf16.msra.mxu0 0
    %598 = vmatpush.bf16.msra.mxu0 0
    %599 = vmatpush.bf16.msra.mxu0 0
    %600 = vmatpush.bf16.msra.mxu0 0
    %601 = vmatpush.bf16.msra.mxu0 %v589
    %602 = vmatpush.bf16.msra.mxu0 %v588
    %603 = vmatmul.bf16.gmra.mxu0 %v593
    %v604 = vpop.f32.mrf.mxu0
    %v605 = vadd.f32 %v578, %v604
    %v606 = vpop.f32.mrf.mxu0
    %v607 = vadd.f32 %v578, %v606
    %608 = vdwg.mxu0
    %v609 = vadd.f32 %v277, %v605
    %v610 = vadd.f32 %v278, %v607
    %v611 = vld [vmem:[%s11] sm:$0x1]
    %v612 = vld [vmem:[%s12] sm:$0x1]
    %v613 = vsel %vm217, %v609, 0.0
    %614 = vadd.xlane.f32.xlu0 %v613
    %v615 = vpop.xlane.xlu0 %614
    %v616 = vsel %vm217, %v610, 0.0
    %617 = vadd.xlane.f32.xlu0 %v616
    %v618 = vpop.xlane.xlu0 %617
    %v619 = vmul.f32 %v615, %v230
    %v620 = vmul.f32 %v618, %v230
    %v621 = vsub.f32 %v609, %v619
    %v622 = vsub.f32 %v610, %v620
    %v623 = vmul.f32 %v621, %v621
    %v624 = vmul.f32 %v622, %v622
    %v625 = vsel %vm217, %v623, 0.0
    %626 = vadd.xlane.f32.xlu0 %v625
    %v627 = vpop.xlane.xlu0 %626
    %v628 = vsel %vm217, %v624, 0.0
    %629 = vadd.xlane.f32.xlu0 %v628
    %v630 = vpop.xlane.xlu0 %629
    %v631 = vmul.f32 %v627, %v230
    %v632 = vmul.f32 %v630, %v230
    %v633 = vadd.f32 %v631, 1e-12
    %v634 = vadd.f32 %v632, 1e-12
    %v635 = vrsqrt.pop %v633
    %v636 = vmul.f32 %v635, %v633
    %v637 = vmul.f32 %v636, %v635
    %v638 = vmul.f32 0.5, %v637
    %v639 = vsub.f32 1.5, %v638
    %v640 = vmul.f32 %v635, %v639
    %vm641 = vweird.f32 %v633
    %vm642 = vweird.f32 %v635
    %vm643 = vmor %vm641, %vm642
    %v644 = vsel %vm643, %v635, %v640
    %v645 = vrsqrt.pop %v634
    %v646 = vmul.f32 %v645, %v634
    %v647 = vmul.f32 %v646, %v645
    %v648 = vmul.f32 0.5, %v647
    %v649 = vsub.f32 1.5, %v648
    %v650 = vmul.f32 %v645, %v649
    %vm651 = vweird.f32 %v634
    %vm652 = vweird.f32 %v645
    %vm653 = vmor %vm651, %vm652
    %v654 = vsel %vm653, %v645, %v650
    %v655 = vmul.f32 %v621, %v644
    %v656 = vmul.f32 %v622, %v654
    %v658 = vperm.slane %v611, 0
    %v660 = vmul.f32 %v655, %v658
    %v661 = vmul.f32 %v656, %v658
    %v663 = vperm.slane %v612, 0
    %v665 = vadd.f32 %v660, %v663
    %v666 = vadd.f32 %v661, %v663
    %v667 = vpack.c.bf16 %v666, %v665
    %v668 = vld [vmem:[%s13] sm:$0xf]
    %v669 = vld [vmem:[%s13 + $0x4] sm:$0xf]
    %v670 = vld [vmem:[%s13 + $0x8] sm:$0xf]
    %v671 = vld [vmem:[%s13 + $0xc] sm:$0xf]
    %v672 = vld [vmem:[%s14] sm:$0x1]
    %v674 = vperm.slane %v672, 0
    %v680 = vunpack.c.l.b16 %v668
    %v681 = vunpack.c.l.b16 %v669
    %v682 = vunpack.c.l.b16 %v670
    %v683 = vunpack.c.l.b16 %v671
    %v684 = vpack.c.b16 %v681, %v680
    %v685 = vpack.c.b16 %v683, %v682
    %v689 = vsel %vm217, %v667, 0
    %691 = vmatpush.bf16.msra.mxu0 0
    %692 = vmatpush.bf16.msra.mxu0 0
    %693 = vmatpush.bf16.msra.mxu0 0
    %694 = vmatpush.bf16.msra.mxu0 0
    %695 = vmatpush.bf16.msra.mxu0 0
    %696 = vmatpush.bf16.msra.mxu0 0
    %697 = vmatpush.bf16.msra.mxu0 %v685
    %698 = vmatpush.bf16.msra.mxu0 %v684
    %699 = vmatmul.bf16.gmra.mxu0 %v689
    %v700 = vpop.f32.mrf.mxu0
    %v701 = vadd.f32 %v674, %v700
    %v702 = vpop.f32.mrf.mxu0
    %v703 = vadd.f32 %v674, %v702
    %704 = vdwg.mxu0
    %v705 = vmul.f32 %v701, 0.5
    %v706 = vmul.f32 %v703, 0.5
    %v707 = vmul.f32 %v701, 0.044715
    %v708 = vmul.f32 %v703, 0.044715
    %v709 = vmul.f32 %v707, %v701
    %v710 = vmul.f32 %v708, %v703
    %v711 = vmul.f32 %v709, %v701
    %v712 = vmul.f32 %v710, %v703
    %v713 = vadd.f32 %v701, %v711
    %v714 = vadd.f32 %v703, %v712
    %v715 = vmul.f32 %v713, 0.7978846
    %v716 = vmul.f32 %v714, 0.7978846
    %v717 = vtanh.pop %v715
    %v718 = vtanh.pop %v716
    %v719 = vadd.f32 %v717, 1.0
    %v720 = vadd.f32 %v718, 1.0
    %v721 = vmul.f32 %v705, %v719
    %v722 = vmul.f32 %v706, %v720
    %v723 = vpack.c.bf16 %v722, %v721
    %v724 = vld [vmem:[%s15] sm:$0xf]
    %v725 = vld [vmem:[%s15 + $0x4] sm:$0xf]
    %v726 = vld [vmem:[%s15 + $0x8] sm:$0xf]
    %v727 = vld [vmem:[%s15 + $0xc] sm:$0xf]
    %v728 = vld [vmem:[%s15 + $0x10] sm:$0xf]
    %v729 = vld [vmem:[%s15 + $0x14] sm:$0xf]
    %v730 = vld [vmem:[%s15 + $0x18] sm:$0xf]
    %v731 = vld [vmem:[%s15 + $0x1c] sm:$0xf]
    %v732 = vld [vmem:[%s16] sm:$0x1]
    %v734 = vperm.slane %v732, 0
    %v744 = vunpack.c.l.b16 %v724
    %v745 = vunpack.c.l.b16 %v725
    %v746 = vunpack.c.l.b16 %v726
    %v747 = vunpack.c.l.b16 %v727
    %v748 = vunpack.c.l.b16 %v728
    %v749 = vunpack.c.l.b16 %v729
    %v750 = vunpack.c.l.b16 %v730
    %v751 = vunpack.c.l.b16 %v731
    %v752 = vpack.c.b16 %v745, %v744
    %v753 = vpack.c.b16 %v747, %v746
    %v754 = vpack.c.b16 %v749, %v748
    %v755 = vpack.c.b16 %v751, %v750
    %vm760 = vcmask 523264
    %v762 = vsel %vm760, %v723, 0
    %764 = vmatpush.bf16.msra.mxu0 0
    %765 = vmatpush.bf16.msra.mxu0 0
    %766 = vmatpush.bf16.msra.mxu0 0
    %767 = vmatpush.bf16.msra.mxu0 0
    %768 = vmatpush.bf16.msra.mxu0 %v755
    %769 = vmatpush.bf16.msra.mxu0 %v754
    %770 = vmatpush.bf16.msra.mxu0 %v753
    %771 = vmatpush.bf16.msra.mxu0 %v752
    %772 = vmatmul.bf16.gmra.mxu0 %v762
    %v773 = vpop.f32.mrf.mxu0
    %v774 = vadd.f32 %v734, %v773
    %v775 = vpop.f32.mrf.mxu0
    %v776 = vadd.f32 %v734, %v775
    %777 = vdwg.mxu0
    %v778 = vadd.f32 %v665, %v774
    %v779 = vadd.f32 %v666, %v776
    %v780 = vld [vmem:[%s17] sm:$0x1]
    %v781 = vld [vmem:[%s18] sm:$0x1]
    %v782 = vsel %vm217, %v778, 0.0
    %783 = vadd.xlane.f32.xlu0 %v782
    %v784 = vpop.xlane.xlu0 %783
    %v785 = vsel %vm217, %v779, 0.0
    %786 = vadd.xlane.f32.xlu0 %v785
    %v787 = vpop.xlane.xlu0 %786
    %v788 = vmul.f32 %v784, %v230
    %v789 = vmul.f32 %v787, %v230
    %v790 = vsub.f32 %v778, %v788
    %v791 = vsub.f32 %v779, %v789
    %v792 = vmul.f32 %v790, %v790
    %v793 = vmul.f32 %v791, %v791
    %v794 = vsel %vm217, %v792, 0.0
    %795 = vadd.xlane.f32.xlu0 %v794
    %v796 = vpop.xlane.xlu0 %795
    %v797 = vsel %vm217, %v793, 0.0
    %798 = vadd.xlane.f32.xlu0 %v797
    %v799 = vpop.xlane.xlu0 %798
    %v800 = vmul.f32 %v796, %v230
    %v801 = vmul.f32 %v799, %v230
    %v802 = vadd.f32 %v800, 1e-12
    %v803 = vadd.f32 %v801, 1e-12
    %v804 = vrsqrt.pop %v802
    %v805 = vmul.f32 %v804, %v802
    %v806 = vmul.f32 %v805, %v804
    %v807 = vmul.f32 0.5, %v806
    %v808 = vsub.f32 1.5, %v807
    %v809 = vmul.f32 %v804, %v808
    %vm810 = vweird.f32 %v802
    %vm811 = vweird.f32 %v804
    %vm812 = vmor %vm810, %vm811
    %v813 = vsel %vm812, %v804, %v809
    %v814 = vrsqrt.pop %v803
    %v815 = vmul.f32 %v814, %v803
    %v816 = vmul.f32 %v815, %v814
    %v817 = vmul.f32 0.5, %v816
    %v818 = vsub.f32 1.5, %v817
    %v819 = vmul.f32 %v814, %v818
    %vm820 = vweird.f32 %v803
    %vm821 = vweird.f32 %v814
    %vm822 = vmor %vm820, %vm821
    %v823 = vsel %vm822, %v814, %v819
    %v824 = vmul.f32 %v790, %v813
    %v825 = vmul.f32 %v791, %v823
    %v827 = vperm.slane %v780, 0
    %v829 = vmul.f32 %v824, %v827
    %v830 = vmul.f32 %v825, %v827
    %v832 = vperm.slane %v781, 0
    %v834 = vadd.f32 %v829, %v832
    %v835 = vadd.f32 %v830, %v832
    %v836 = vpack.c.bf16 %v835, %v834
    %s837 = scalar_lea.vmem %s7, 16
    %v838 = vld [vmem:[%s837] sm:$0xf]
    %v839 = vld [vmem:[%s837 + $0x4] sm:$0xf]
    %v840 = vld [vmem:[%s837 + $0x8] sm:$0xf]
    %v841 = vld [vmem:[%s837 + $0xc] sm:$0xf]
    %s842 = scalar_lea.vmem %s8, 1
    %v843 = vld [vmem:[%s842] sm:$0x1]
    %v845 = vperm.slane %v843, 0
    %v851 = vunpack.c.l.b16 %v838
    %v852 = vunpack.c.l.b16 %v839
    %v853 = vunpack.c.l.b16 %v840
    %v854 = vunpack.c.l.b16 %v841
    %v855 = vpack.c.b16 %v852, %v851
    %v856 = vpack.c.b16 %v854, %v853
    %v860 = vsel %vm217, %v836, 0
    %862 = vmatpush.bf16.msra.mxu0 0
    %863 = vmatpush.bf16.msra.mxu0 0
    %864 = vmatpush.bf16.msra.mxu0 0
    %865 = vmatpush.bf16.msra.mxu0 0
    %866 = vmatpush.bf16.msra.mxu0 0
    %867 = vmatpush.bf16.msra.mxu0 0
    %868 = vmatpush.bf16.msra.mxu0 %v856
    %869 = vmatpush.bf16.msra.mxu0 %v855
    %870 = vmatmul.bf16.gmra.mxu0 %v860
    %v871 = vpop.f32.mrf.mxu0
    %v872 = vadd.f32 %v845, %v871
    %v873 = vpop.f32.mrf.mxu0
    %v874 = vadd.f32 %v845, %v873
    %875 = vdwg.mxu0
    %v876 = vpack.c.bf16 %v872, %v872
    %v877 = vpack.c.bf16 %v874, %v874
    %880 = vrot.lane.b32.xlu0 %v876, 112
    %v881 = vpop.permute.xlu0 %880
    %882 = vrot.lane.b32.xlu0 %v877, 112
    %v883 = vpop.permute.xlu0 %882
    %v884 = vunpack.c.l.b16 %v876
    %v885 = vpack.c.b16 %v884, %v884
    %886 = vrot.lane.b32.xlu0 %v885, 96
    %v887 = vpop.permute.xlu0 %886
    %v889 = vsel %vm339, %v876, 0
    %v892 = vsel %vm339, %v887, 0
    %894 = vmatpush.bf16.xpose.msra.mxu0 0
    %895 = vmatpush.bf16.xpose.msra.mxu0 0
    %896 = vmatpush.bf16.xpose.msra.mxu0 0
    %897 = vmatpush.bf16.xpose.msra.mxu0 0
    %898 = vmatpush.bf16.xpose.msra.mxu0 0
    %899 = vmatpush.bf16.xpose.msra.mxu0 0
    %900 = vmatpush.bf16.xpose.msra.mxu0 0
    %901 = vmatpush.bf16.xpose.msra.mxu0 %v892
    %902 = vmatmul.bf16.gmra.mxu0 %v889
    %v903 = vpop.f32.mrf.mxu0
    %v904 = vadd.f32 %v331, %v903
    %v905 = vpop.f32.mrf.mxu0
    %906 = vdwg.mxu0
    %v907 = vunpack.c.l.b16 %v877
    %v908 = vpack.c.b16 %v907, %v907
    %909 = vrot.lane.b32.xlu0 %v908, 96
    %v910 = vpop.permute.xlu0 %909
    %v912 = vsel %vm339, %v877, 0
    %v915 = vsel %vm339, %v910, 0
    %917 = vmatpush.bf16.xpose.msra.mxu0 0
    %918 = vmatpush.bf16.xpose.msra.mxu0 0
    %919 = vmatpush.bf16.xpose.msra.mxu0 0
    %920 = vmatpush.bf16.xpose.msra.mxu0 0
    %921 = vmatpush.bf16.xpose.msra.mxu0 0
    %922 = vmatpush.bf16.xpose.msra.mxu0 0
    %923 = vmatpush.bf16.xpose.msra.mxu0 0
    %924 = vmatpush.bf16.xpose.msra.mxu0 %v915
    %925 = vmatmul.bf16.gmra.mxu0 %v912
    %v926 = vpop.f32.mrf.mxu0
    %v927 = vadd.f32 %v332, %v926
    %v928 = vpop.f32.mrf.mxu0
    %929 = vdwg.mxu0
    %v930 = vunpack.c.l.b16 %v881
    %v931 = vpack.c.b16 %v930, %v930
    %932 = vrot.lane.b32.xlu0 %v931, 96
    %v933 = vpop.permute.xlu0 %932
    %v935 = vsel %vm339, %v881, 0
    %v938 = vsel %vm339, %v933, 0
    %940 = vmatpush.bf16.xpose.msra.mxu0 0
    %941 = vmatpush.bf16.xpose.msra.mxu0 0
    %942 = vmatpush.bf16.xpose.msra.mxu0 0
    %943 = vmatpush.bf16.xpose.msra.mxu0 0
    %944 = vmatpush.bf16.xpose.msra.mxu0 0
    %945 = vmatpush.bf16.xpose.msra.mxu0 0
    %946 = vmatpush.bf16.xpose.msra.mxu0 0
    %947 = vmatpush.bf16.xpose.msra.mxu0 %v938
    %948 = vmatmul.bf16.gmra.mxu0 %v935
    %v949 = vpop.f32.mrf.mxu0
    %v950 = vadd.f32 %v331, %v949
    %v951 = vpop.f32.mrf.mxu0
    %952 = vdwg.mxu0
    %v953 = vunpack.c.l.b16 %v883
    %v954 = vpack.c.b16 %v953, %v953
    %955 = vrot.lane.b32.xlu0 %v954, 96
    %v956 = vpop.permute.xlu0 %955
    %v958 = vsel %vm339, %v883, 0
    %v961 = vsel %vm339, %v956, 0
    %963 = vmatpush.bf16.xpose.msra.mxu0 0
    %964 = vmatpush.bf16.xpose.msra.mxu0 0
    %965 = vmatpush.bf16.xpose.msra.mxu0 0
    %966 = vmatpush.bf16.xpose.msra.mxu0 0
    %967 = vmatpush.bf16.xpose.msra.mxu0 0
    %968 = vmatpush.bf16.xpose.msra.mxu0 0
    %969 = vmatpush.bf16.xpose.msra.mxu0 0
    %970 = vmatpush.bf16.xpose.msra.mxu0 %v961
    %971 = vmatmul.bf16.gmra.mxu0 %v958
    %v972 = vpop.f32.mrf.mxu0
    %v973 = vadd.f32 %v332, %v972
    %v974 = vpop.f32.mrf.mxu0
    %975 = vdwg.mxu0
    %v976 = vsel %vm428, %v904, -inf
    %977 = vmax.xlane.f32.xlu0 %v976
    %v978 = vpop.xlane.xlu0 %977
    %v979 = vsel %vm428, %v927, -inf
    %980 = vmax.xlane.f32.xlu0 %v979
    %v981 = vpop.xlane.xlu0 %980
    %v982 = vsel %vm428, %v950, -inf
    %983 = vmax.xlane.f32.xlu0 %v982
    %v984 = vpop.xlane.xlu0 %983
    %v985 = vsel %vm428, %v973, -inf
    %986 = vmax.xlane.f32.xlu0 %v985
    %v987 = vpop.xlane.xlu0 %986
    %v988 = vsub.f32 %v904, %v978
    %v989 = vsub.f32 %v927, %v981
    %v990 = vsub.f32 %v950, %v984
    %v991 = vsub.f32 %v973, %v987
    %v992 = vmul.f32 %v988, 1.442695
    %v993 = vpow.pop %v992
    %v994 = vmul.f32 %v989, 1.442695
    %v995 = vpow.pop %v994
    %v996 = vmul.f32 %v990, 1.442695
    %v997 = vpow.pop %v996
    %v998 = vmul.f32 %v991, 1.442695
    %v999 = vpow.pop %v998
    %v1000 = vsel %vm428, %v993, 0.0
    %1001 = vadd.xlane.f32.xlu0 %v1000
    %v1002 = vpop.xlane.xlu0 %1001
    %v1003 = vsel %vm428, %v995, 0.0
    %1004 = vadd.xlane.f32.xlu0 %v1003
    %v1005 = vpop.xlane.xlu0 %1004
    %v1006 = vsel %vm428, %v997, 0.0
    %1007 = vadd.xlane.f32.xlu0 %v1006
    %v1008 = vpop.xlane.xlu0 %1007
    %v1009 = vsel %vm428, %v999, 0.0
    %1010 = vadd.xlane.f32.xlu0 %v1009
    %v1011 = vpop.xlane.xlu0 %1010
    %v1012 = vrcp.pop %v1002
    %v1013 = vrcp.pop %v1005
    %v1014 = vrcp.pop %v1008
    %v1015 = vrcp.pop %v1011
    %v1016 = vmul.f32 %v993, %v1012
    %v1017 = vmul.f32 %v995, %v1013
    %v1018 = vmul.f32 %v997, %v1014
    %v1019 = vmul.f32 %v999, %v1015
    %v1020 = vpack.c.bf16 %v1016, %v1016
    %v1021 = vpack.c.bf16 %v1017, %v1017
    %v1022 = vpack.c.bf16 %v1018, %v1018
    %v1023 = vpack.c.bf16 %v1019, %v1019
    %1024 = vrot.lane.b32.xlu0 %v885, 64
    %v1025 = vpop.permute.xlu0 %1024
    %v1027 = vsel %vm428, %v1020, 0
    %v1030 = vsel %vm191, %v1025, 0
    %1032 = vmatpush.bf16.msra.mxu0 0
    %1033 = vmatpush.bf16.msra.mxu0 0
    %1034 = vmatpush.bf16.msra.mxu0 0
    %1035 = vmatpush.bf16.msra.mxu0 0
    %1036 = vmatpush.bf16.msra.mxu0 0
    %1037 = vmatpush.bf16.msra.mxu0 0
    %1038 = vmatpush.bf16.msra.mxu0 0
    %1039 = vmatpush.bf16.msra.mxu0 %v1030
    %1040 = vmatmul.bf16.gmra.mxu0 %v1027
    %v1041 = vpop.f32.mrf.mxu0
    %v1042 = vadd.f32 0.0, %v1041
    %v1043 = vpop.f32.mrf.mxu0
    %1044 = vdwg.mxu0
    %1045 = vrot.lane.b32.xlu0 %v908, 64
    %v1046 = vpop.permute.xlu0 %1045
    %v1048 = vsel %vm428, %v1021, 0
    %v1051 = vsel %vm191, %v1046, 0
    %1053 = vmatpush.bf16.msra.mxu0 0
    %1054 = vmatpush.bf16.msra.mxu0 0
    %1055 = vmatpush.bf16.msra.mxu0 0
    %1056 = vmatpush.bf16.msra.mxu0 0
    %1057 = vmatpush.bf16.msra.mxu0 0
    %1058 = vmatpush.bf16.msra.mxu0 0
    %1059 = vmatpush.bf16.msra.mxu0 0
    %1060 = vmatpush.bf16.msra.mxu0 %v1051
    %1061 = vmatmul.bf16.gmra.mxu0 %v1048
    %v1062 = vpop.f32.mrf.mxu0
    %v1063 = vadd.f32 0.0, %v1062
    %v1064 = vpop.f32.mrf.mxu0
    %1065 = vdwg.mxu0
    %1066 = vrot.lane.b32.xlu0 %v931, 64
    %v1067 = vpop.permute.xlu0 %1066
    %v1069 = vsel %vm428, %v1022, 0
    %v1072 = vsel %vm191, %v1067, 0
    %1074 = vmatpush.bf16.msra.mxu0 0
    %1075 = vmatpush.bf16.msra.mxu0 0
    %1076 = vmatpush.bf16.msra.mxu0 0
    %1077 = vmatpush.bf16.msra.mxu0 0
    %1078 = vmatpush.bf16.msra.mxu0 0
    %1079 = vmatpush.bf16.msra.mxu0 0
    %1080 = vmatpush.bf16.msra.mxu0 0
    %1081 = vmatpush.bf16.msra.mxu0 %v1072
    %1082 = vmatmul.bf16.gmra.mxu0 %v1069
    %v1083 = vpop.f32.mrf.mxu0
    %v1084 = vadd.f32 0.0, %v1083
    %v1085 = vpop.f32.mrf.mxu0
    %1086 = vdwg.mxu0
    %1087 = vrot.lane.b32.xlu0 %v954, 64
    %v1088 = vpop.permute.xlu0 %1087
    %v1090 = vsel %vm428, %v1023, 0
    %v1093 = vsel %vm191, %v1088, 0
    %1095 = vmatpush.bf16.msra.mxu0 0
    %1096 = vmatpush.bf16.msra.mxu0 0
    %1097 = vmatpush.bf16.msra.mxu0 0
    %1098 = vmatpush.bf16.msra.mxu0 0
    %1099 = vmatpush.bf16.msra.mxu0 0
    %1100 = vmatpush.bf16.msra.mxu0 0
    %1101 = vmatpush.bf16.msra.mxu0 0
    %1102 = vmatpush.bf16.msra.mxu0 %v1093
    %1103 = vmatmul.bf16.gmra.mxu0 %v1090
    %v1104 = vpop.f32.mrf.mxu0
    %v1105 = vadd.f32 0.0, %v1104
    %v1106 = vpop.f32.mrf.mxu0
    %1107 = vdwg.mxu0
    %1110 = vrot.lane.b32.xlu0 %v1084, 16
    %v1111 = vpop.permute.xlu0 %1110
    %1112 = vrot.lane.b32.xlu0 %v1105, 16
    %v1113 = vpop.permute.xlu0 %1112
    %v1116 = vsel %vm339, %v1042, %v1111
    %v1117 = vsel %vm339, %v1063, %v1113
    %v1118 = vpack.c.bf16 %v1117, %v1116
    %s1119 = scalar_lea.vmem %s9, 16
    %v1120 = vld [vmem:[%s1119] sm:$0xf]
    %v1121 = vld [vmem:[%s1119 + $0x4] sm:$0xf]
    %v1122 = vld [vmem:[%s1119 + $0x8] sm:$0xf]
    %v1123 = vld [vmem:[%s1119 + $0xc] sm:$0xf]
    %s1124 = scalar_lea.vmem %s10, 1
    %v1125 = vld [vmem:[%s1124] sm:$0x1]
    %v1127 = vperm.slane %v1125, 0
    %v1133 = vunpack.c.l.b16 %v1120
    %v1134 = vunpack.c.l.b16 %v1121
    %v1135 = vunpack.c.l.b16 %v1122
    %v1136 = vunpack.c.l.b16 %v1123
    %v1137 = vpack.c.b16 %v1134, %v1133
    %v1138 = vpack.c.b16 %v1136, %v1135
    %v1142 = vsel %vm217, %v1118, 0
    %1144 = vmatpush.bf16.msra.mxu0 0
    %1145 = vmatpush.bf16.msra.mxu0 0
    %1146 = vmatpush.bf16.msra.mxu0 0
    %1147 = vmatpush.bf16.msra.mxu0 0
    %1148 = vmatpush.bf16.msra.mxu0 0
    %1149 = vmatpush.bf16.msra.mxu0 0
    %1150 = vmatpush.bf16.msra.mxu0 %v1138
    %1151 = vmatpush.bf16.msra.mxu0 %v1137
    %1152 = vmatmul.bf16.gmra.mxu0 %v1142
    %v1153 = vpop.f32.mrf.mxu0
    %v1154 = vadd.f32 %v1127, %v1153
    %v1155 = vpop.f32.mrf.mxu0
    %v1156 = vadd.f32 %v1127, %v1155
    %1157 = vdwg.mxu0
    %v1158 = vadd.f32 %v834, %v1154
    %v1159 = vadd.f32 %v835, %v1156
    %s1160 = scalar_lea.vmem %s11, 1
    %v1161 = vld [vmem:[%s1160] sm:$0x1]
    %s1162 = scalar_lea.vmem %s12, 1
    %v1163 = vld [vmem:[%s1162] sm:$0x1]
    %v1164 = vsel %vm217, %v1158, 0.0
    %1165 = vadd.xlane.f32.xlu0 %v1164
    %v1166 = vpop.xlane.xlu0 %1165
    %v1167 = vsel %vm217, %v1159, 0.0
    %1168 = vadd.xlane.f32.xlu0 %v1167
    %v1169 = vpop.xlane.xlu0 %1168
    %v1170 = vmul.f32 %v1166, %v230
    %v1171 = vmul.f32 %v1169, %v230
    %v1172 = vsub.f32 %v1158, %v1170
    %v1173 = vsub.f32 %v1159, %v1171
    %v1174 = vmul.f32 %v1172, %v1172
    %v1175 = vmul.f32 %v1173, %v1173
    %v1176 = vsel %vm217, %v1174, 0.0
    %1177 = vadd.xlane.f32.xlu0 %v1176
    %v1178 = vpop.xlane.xlu0 %1177
    %v1179 = vsel %vm217, %v1175, 0.0
    %1180 = vadd.xlane.f32.xlu0 %v1179
    %v1181 = vpop.xlane.xlu0 %1180
    %v1182 = vmul.f32 %v1178, %v230
    %v1183 = vmul.f32 %v1181, %v230
    %v1184 = vadd.f32 %v1182, 1e-12
    %v1185 = vadd.f32 %v1183, 1e-12
    %v1186 = vrsqrt.pop %v1184
    %v1187 = vmul.f32 %v1186, %v1184
    %v1188 = vmul.f32 %v1187, %v1186
    %v1189 = vmul.f32 0.5, %v1188
    %v1190 = vsub.f32 1.5, %v1189
    %v1191 = vmul.f32 %v1186, %v1190
    %vm1192 = vweird.f32 %v1184
    %vm1193 = vweird.f32 %v1186
    %vm1194 = vmor %vm1192, %vm1193
    %v1195 = vsel %vm1194, %v1186, %v1191
    %v1196 = vrsqrt.pop %v1185
    %v1197 = vmul.f32 %v1196, %v1185
    %v1198 = vmul.f32 %v1197, %v1196
    %v1199 = vmul.f32 0.5, %v1198
    %v1200 = vsub.f32 1.5, %v1199
    %v1201 = vmul.f32 %v1196, %v1200
    %vm1202 = vweird.f32 %v1185
    %vm1203 = vweird.f32 %v1196
    %vm1204 = vmor %vm1202, %vm1203
    %v1205 = vsel %vm1204, %v1196, %v1201
    %v1206 = vmul.f32 %v1172, %v1195
    %v1207 = vmul.f32 %v1173, %v1205
    %v1209 = vperm.slane %v1161, 0
    %v1211 = vmul.f32 %v1206, %v1209
    %v1212 = vmul.f32 %v1207, %v1209
    %v1214 = vperm.slane %v1163, 0
    %v1216 = vadd.f32 %v1211, %v1214
    %v1217 = vadd.f32 %v1212, %v1214
    %v1218 = vpack.c.bf16 %v1217, %v1216
    %s1219 = scalar_lea.vmem %s13, 16
    %v1220 = vld [vmem:[%s1219] sm:$0xf]
    %v1221 = vld [vmem:[%s1219 + $0x4] sm:$0xf]
    %v1222 = vld [vmem:[%s1219 + $0x8] sm:$0xf]
    %v1223 = vld [vmem:[%s1219 + $0xc] sm:$0xf]
    %s1224 = scalar_lea.vmem %s14, 1
    %v1225 = vld [vmem:[%s1224] sm:$0x1]
    %v1227 = vperm.slane %v1225, 0
    %v1233 = vunpack.c.l.b16 %v1220
    %v1234 = vunpack.c.l.b16 %v1221
    %v1235 = vunpack.c.l.b16 %v1222
    %v1236 = vunpack.c.l.b16 %v1223
    %v1237 = vpack.c.b16 %v1234, %v1233
    %v1238 = vpack.c.b16 %v1236, %v1235
    %v1242 = vsel %vm217, %v1218, 0
    %1244 = vmatpush.bf16.msra.mxu0 0
    %1245 = vmatpush.bf16.msra.mxu0 0
    %1246 = vmatpush.bf16.msra.mxu0 0
    %1247 = vmatpush.bf16.msra.mxu0 0
    %1248 = vmatpush.bf16.msra.mxu0 0
    %1249 = vmatpush.bf16.msra.mxu0 0
    %1250 = vmatpush.bf16.msra.mxu0 %v1238
    %1251 = vmatpush.bf16.msra.mxu0 %v1237
    %1252 = vmatmul.bf16.gmra.mxu0 %v1242
    %v1253 = vpop.f32.mrf.mxu0
    %v1254 = vadd.f32 %v1227, %v1253
    %v1255 = vpop.f32.mrf.mxu0
    %v1256 = vadd.f32 %v1227, %v1255
    %1257 = vdwg.mxu0
    %v1258 = vmul.f32 %v1254, 0.5
    %v1259 = vmul.f32 %v1256, 0.5
    %v1260 = vmul.f32 %v1254, 0.044715
    %v1261 = vmul.f32 %v1256, 0.044715
    %v1262 = vmul.f32 %v1260, %v1254
    %v1263 = vmul.f32 %v1261, %v1256
    %v1264 = vmul.f32 %v1262, %v1254
    %v1265 = vmul.f32 %v1263, %v1256
    %v1266 = vadd.f32 %v1254, %v1264
    %v1267 = vadd.f32 %v1256, %v1265
    %v1268 = vmul.f32 %v1266, 0.7978846
    %v1269 = vmul.f32 %v1267, 0.7978846
    %v1270 = vtanh.pop %v1268
    %v1271 = vtanh.pop %v1269
    %v1272 = vadd.f32 %v1270, 1.0
    %v1273 = vadd.f32 %v1271, 1.0
    %v1274 = vmul.f32 %v1258, %v1272
    %v1275 = vmul.f32 %v1259, %v1273
    %v1276 = vpack.c.bf16 %v1275, %v1274
    %s1277 = scalar_lea.vmem %s15, 32
    %v1278 = vld [vmem:[%s1277] sm:$0xf]
    %v1279 = vld [vmem:[%s1277 + $0x4] sm:$0xf]
    %v1280 = vld [vmem:[%s1277 + $0x8] sm:$0xf]
    %v1281 = vld [vmem:[%s1277 + $0xc] sm:$0xf]
    %v1282 = vld [vmem:[%s1277 + $0x10] sm:$0xf]
    %v1283 = vld [vmem:[%s1277 + $0x14] sm:$0xf]
    %v1284 = vld [vmem:[%s1277 + $0x18] sm:$0xf]
    %v1285 = vld [vmem:[%s1277 + $0x1c] sm:$0xf]
    %s1286 = scalar_lea.vmem %s16, 1
    %v1287 = vld [vmem:[%s1286] sm:$0x1]
    %v1289 = vperm.slane %v1287, 0
    %v1299 = vunpack.c.l.b16 %v1278
    %v1300 = vunpack.c.l.b16 %v1279
    %v1301 = vunpack.c.l.b16 %v1280
    %v1302 = vunpack.c.l.b16 %v1281
    %v1303 = vunpack.c.l.b16 %v1282
    %v1304 = vunpack.c.l.b16 %v1283
    %v1305 = vunpack.c.l.b16 %v1284
    %v1306 = vunpack.c.l.b16 %v1285
    %v1307 = vpack.c.b16 %v1300, %v1299
    %v1308 = vpack.c.b16 %v1302, %v1301
    %v1309 = vpack.c.b16 %v1304, %v1303
    %v1310 = vpack.c.b16 %v1306, %v1305
    %v1316 = vsel %vm760, %v1276, 0
    %1318 = vmatpush.bf16.msra.mxu0 0
    %1319 = vmatpush.bf16.msra.mxu0 0
    %1320 = vmatpush.bf16.msra.mxu0 0
    %1321 = vmatpush.bf16.msra.mxu0 0
    %1322 = vmatpush.bf16.msra.mxu0 %v1310
    %1323 = vmatpush.bf16.msra.mxu0 %v1309
    %1324 = vmatpush.bf16.msra.mxu0 %v1308
    %1325 = vmatpush.bf16.msra.mxu0 %v1307
    %1326 = vmatmul.bf16.gmra.mxu0 %v1316
    %v1327 = vpop.f32.mrf.mxu0
    %v1328 = vadd.f32 %v1289, %v1327
    %v1329 = vpop.f32.mrf.mxu0
    %v1330 = vadd.f32 %v1289, %v1329
    %1331 = vdwg.mxu0
    %v1332 = vadd.f32 %v1216, %v1328
    %v1333 = vadd.f32 %v1217, %v1330
    %s1334 = scalar_lea.vmem %s17, 1
    %v1335 = vld [vmem:[%s1334] sm:$0x1]
    %s1336 = scalar_lea.vmem %s18, 1
    %v1337 = vld [vmem:[%s1336] sm:$0x1]
    %v1338 = vsel %vm217, %v1332, 0.0
    %1339 = vadd.xlane.f32.xlu0 %v1338
    %v1340 = vpop.xlane.xlu0 %1339
    %v1341 = vsel %vm217, %v1333, 0.0
    %1342 = vadd.xlane.f32.xlu0 %v1341
    %v1343 = vpop.xlane.xlu0 %1342
    %v1344 = vmul.f32 %v1340, %v230
    %v1345 = vmul.f32 %v1343, %v230
    %v1346 = vsub.f32 %v1332, %v1344
    %v1347 = vsub.f32 %v1333, %v1345
    %v1348 = vmul.f32 %v1346, %v1346
    %v1349 = vmul.f32 %v1347, %v1347
    %v1350 = vsel %vm217, %v1348, 0.0
    %1351 = vadd.xlane.f32.xlu0 %v1350
    %v1352 = vpop.xlane.xlu0 %1351
    %v1353 = vsel %vm217, %v1349, 0.0
    %1354 = vadd.xlane.f32.xlu0 %v1353
    %v1355 = vpop.xlane.xlu0 %1354
    %v1356 = vmul.f32 %v1352, %v230
    %v1357 = vmul.f32 %v1355, %v230
    %v1358 = vadd.f32 %v1356, 1e-12
    %v1359 = vadd.f32 %v1357, 1e-12
    %v1360 = vrsqrt.pop %v1358
    %v1361 = vmul.f32 %v1360, %v1358
    %v1362 = vmul.f32 %v1361, %v1360
    %v1363 = vmul.f32 0.5, %v1362
    %v1364 = vsub.f32 1.5, %v1363
    %v1365 = vmul.f32 %v1360, %v1364
    %vm1366 = vweird.f32 %v1358
    %vm1367 = vweird.f32 %v1360
    %vm1368 = vmor %vm1366, %vm1367
    %v1369 = vsel %vm1368, %v1360, %v1365
    %v1370 = vrsqrt.pop %v1359
    %v1371 = vmul.f32 %v1370, %v1359
    %v1372 = vmul.f32 %v1371, %v1370
    %v1373 = vmul.f32 0.5, %v1372
    %v1374 = vsub.f32 1.5, %v1373
    %v1375 = vmul.f32 %v1370, %v1374
    %vm1376 = vweird.f32 %v1359
    %vm1377 = vweird.f32 %v1370
    %vm1378 = vmor %vm1376, %vm1377
    %v1379 = vsel %vm1378, %v1370, %v1375
    %v1380 = vmul.f32 %v1346, %v1369
    %v1381 = vmul.f32 %v1347, %v1379
    %v1383 = vperm.slane %v1335, 0
    %v1385 = vmul.f32 %v1380, %v1383
    %v1386 = vmul.f32 %v1381, %v1383
    %v1388 = vperm.slane %v1337, 0
    %v1390 = vadd.f32 %v1385, %v1388
    %v1391 = vadd.f32 %v1386, %v1388
    %v1392 = vpack.c.bf16 %v1390, %v1390
    %v1393 = vpack.c.bf16 %v1391, %v1391
    %v1394 = vld [vmem:[%s19] sm:$0xf]
    %v1395 = vld [vmem:[%s19 + $0x4] sm:$0xf]
    %v1396 = vld [vmem:[%s19 + $0x8] sm:$0xf]
    %v1397 = vld [vmem:[%s19 + $0xc] sm:$0xf]
    %v1398 = vld [vmem:[%s20] sm:$0x1]
    %v1400 = vperm.slane %v1398, 0
    %v1404 = vunpack.c.l.b16 %v1392
    %v1405 = vunpack.c.l.b16 %v1393
    %v1406 = vrot.slane %v1405, 7
    %vm1407 = vcmask 1041409
    %v1408 = vsel %vm1407, %v1406, %v1404
    %v1409 = vpack.c.b16 %v1408, %v1408
    %v1414 = vunpack.c.l.b16 %v1394
    %v1415 = vunpack.c.l.b16 %v1395
    %v1416 = vunpack.c.l.b16 %v1396
    %v1417 = vunpack.c.l.b16 %v1397
    %v1418 = vpack.c.b16 %v1415, %v1414
    %v1419 = vpack.c.b16 %v1417, %v1416
    %v1423 = vsel %vm217, %v1409, 0
    %1425 = vmatpush.bf16.msra.mxu0 0
    %1426 = vmatpush.bf16.msra.mxu0 0
    %1427 = vmatpush.bf16.msra.mxu0 0
    %1428 = vmatpush.bf16.msra.mxu0 0
    %1429 = vmatpush.bf16.msra.mxu0 0
    %1430 = vmatpush.bf16.msra.mxu0 0
    %1431 = vmatpush.bf16.msra.mxu0 %v1419
    %1432 = vmatpush.bf16.msra.mxu0 %v1418
    %1433 = vmatmul.bf16.gmra.mxu0 %v1423
    %v1434 = vpop.f32.mrf.mxu0
    %v1435 = vadd.f32 %v1400, %v1434
    %v1436 = vpop.f32.mrf.mxu0
    %1437 = vdwg.mxu0
    %v1438 = vtanh.pop %v1435
    %v1439 = vpack.c.bf16 %v1438, %v1438
    %v1440 = vld [vmem:[%s21] sm:$0xf]
    %v1441 = vld [vmem:[%s21 + $0x4] sm:$0xf]
    %v1442 = vld [vmem:[%s21 + $0x8] sm:$0xf]
    %v1443 = vld [vmem:[%s21 + $0xc] sm:$0xf]
    %v1444 = vld [vmem:[%s22] sm:$0x1]
    %v1446 = vperm.slane %v1444, 0
    %v1452 = vunpack.c.l.b16 %v1440
    %v1453 = vunpack.c.l.b16 %v1441
    %v1454 = vunpack.c.l.b16 %v1442
    %v1455 = vunpack.c.l.b16 %v1443
    %v1456 = vpack.c.b16 %v1453, %v1452
    %v1457 = vpack.c.b16 %v1455, %v1454
    %v1461 = vsel %vm217, %v1439, 0
    %1463 = vmatpush.bf16.msra.mxu0 0
    %1464 = vmatpush.bf16.msra.mxu0 0
    %1465 = vmatpush.bf16.msra.mxu0 0
    %1466 = vmatpush.bf16.msra.mxu0 0
    %1467 = vmatpush.bf16.msra.mxu0 0
    %1468 = vmatpush.bf16.msra.mxu0 0
    %1469 = vmatpush.bf16.msra.mxu0 %v1457
    %1470 = vmatpush.bf16.msra.mxu0 %v1456
    %1471 = vmatmul.bf16.gmra.mxu0 %v1461
    %v1472 = vpop.f32.mrf.mxu0
    %v1473 = vadd.f32 %v1446, %v1472
    %v1474 = vpop.f32.mrf.mxu0
    %1475 = vdwg.mxu0
    %v1476 = vpack.c.bf16 %v1473, %v1473
    %v1477 = vld [vmem:[%s23] sm:$0xf]
    %v1478 = vld [vmem:[%s23 + $0x4] sm:$0xf]
    %v1479 = vld [vmem:[%s23 + $0x8] sm:$0xf]
    %v1480 = vld [vmem:[%s23 + $0xc] sm:$0xf]
    %v1481 = vld [vmem:[%s24] sm:$0x1]
    %v1483 = vperm.slane %v1481, 0
    %v1489 = vunpack.c.l.b16 %v1477
    %v1490 = vunpack.c.l.b16 %v1478
    %v1491 = vunpack.c.l.b16 %v1479
    %v1492 = vunpack.c.l.b16 %v1480
    %v1493 = vpack.c.b16 %v1490, %v1489
    %v1494 = vpack.c.b16 %v1492, %v1491
    %v1498 = vsel %vm217, %v1476, 0
    %1500 = vmatpush.bf16.msra.mxu0 0
    %1501 = vmatpush.bf16.msra.mxu0 0
    %1502 = vmatpush.bf16.msra.mxu0 0
    %1503 = vmatpush.bf16.msra.mxu0 0
    %1504 = vmatpush.bf16.msra.mxu0 0
    %1505 = vmatpush.bf16.msra.mxu0 0
    %1506 = vmatpush.bf16.msra.mxu0 %v1494
    %1507 = vmatpush.bf16.msra.mxu0 %v1493
    %1508 = vmatmul.bf16.gmra.mxu0 %v1498
    %v1509 = vpop.f32.mrf.mxu0
    %v1510 = vadd.f32 %v1483, %v1509
    %v1511 = vpop.f32.mrf.mxu0
    %1512 = vdwg.mxu0
    %vm1513 = vcmask 17408
    %1514 = vst.msk [vmem:[#allocation5] sm:$0x3] %vm1513, %v1510
    // Predicated region
    $region106: #{forward.1} parent=1 // pred_check
      _
    $region107: #{forward.1} parent=1 // pred_check_branch
      %1516 = sbr.rel (0) target = $region109
    $region108: #{forward.1} parent=1 // pred_region
      %1518 = vsyncadd [#allocation3], 0
      %s1520 = sshll.u32 [#allocation5], 4
      %s1521 = int_to_ptr.vmem [resolvable:$true] %s1520
      %s1522 = sshll.u32 %s25, 4
      %s1523 = int_to_ptr.hbm [resolvable:$true] %s1522
      %1525 = dma.vmem_to_hbm [thread:$0]  %s1521, 32, %s1523, [#allocation3]
    $region109: #{forward.1} parent=1 // pred_fallthru
      _
    // Predicated region
    $region110: #{forward.1} parent=1 // pred_check
      _
    $region111: #{forward.1} parent=1 // pred_check_branch
      %1527 = sbr.rel (0) target = $region113
    $region112: #{forward.1} parent=1 // pred_region
      %1529 = dma.done [#allocation3], 32
    $region113: #{forward.1} parent=1 // pred_fallthru
      _
    %1530 = vsyncpa [#allocation3], 1
    %1531 = vsyncpa [#allocation4], 1

</llo_original>
